<compile_context>
chip_gen: v7x
topology: tpu7x:2x2x1
jax: 0.10.0
libtpu: 0.0.40
codegen_flags: <defaults>
</compile_context>

<pallas_src>
import jax
import jax.numpy as jnp
import numpy as np
from jax.experimental import pallas as pl
from jax.experimental.pallas import tpu as pltpu

# ----------------------------- model dims -----------------------------------
B = 2        # batch
S = 8        # src_len
D = 128      # d_model
H = 4        # heads
DH = D // H  # dim per head
DFF = 256    # d_ff
BS = B * S   # flattened tokens
EPS = 1e-6
NEG = -1e18


def _layernorm(x, g, b):
    # Fused reductions: sum and sum-of-squares are independent XLU passes,
    # var = E[x^2] - mean^2.  x: (S, D) f32, g/b: (1, D) f32.
    s = jnp.sum(x, axis=-1, keepdims=True)
    s2 = jnp.sum(x * x, axis=-1, keepdims=True)
    mean = s * (1.0 / D)
    var = s2 * (1.0 / D) - mean * mean
    return (x - mean) * jax.lax.rsqrt(var + EPS) * g + b


def encoder_layer_kernel(
    lens_ref,                       # SMEM (B,) int32 -- scalar prefetch
    x_ref,                          # (S, D) f32
    ln1g_ref, ln1b_ref,             # (1, D) f32
    wqkv_ref, bqkv_ref,             # (D, 3D) bf16, (1, 3D) f32
    wo_ref, bo_ref,                 # (D, D) bf16, (1, D) f32
    ln2g_ref, ln2b_ref,             # (1, D) f32
    w1_ref, b1_ref,                 # (D, DFF) bf16, (1, DFF) f32
    w2_ref, b2_ref,                 # (DFF, D) bf16, (1, D) f32
    o_ref,                          # (S, D) f32
):
    b = pl.program_id(0)
    x = x_ref[...]                  # (S, D) f32

    # Additive key-padding bias built in-kernel from prefetched lengths:
    # keys >= length get -1e18.  One select here, then plain f32 adds per head.
    key_pos = jax.lax.broadcasted_iota(jnp.int32, (S, S), 1)
    bias = jnp.where(key_pos >= lens_ref[b], jnp.float32(NEG), jnp.float32(0.0))

    # ---- self-attention branch (pre-LN) ---------------------------------
    h = _layernorm(x, ln1g_ref[...], ln1b_ref[...])

    # Fused QKV projection: one (S, D) x (D, 3D) MXU push, bf16 in / f32 acc.
    qkv = jnp.dot(h.astype(jnp.bfloat16), wqkv_ref[...],
                  preferred_element_type=jnp.float32) + bqkv_ref[...]   # (S, 3D) f32

    scale = 1.0 / jnp.sqrt(jnp.float32(DH))
    ctx_parts = []
    for hh in range(H):             # H small & static -> unrolled
        lo = hh * DH
        qh = (qkv[:, lo:lo + DH] * scale).astype(jnp.bfloat16)          # (S, DH)
        kh = qkv[:, D + lo:D + lo + DH].astype(jnp.bfloat16)            # (S, DH)
        vh = qkv[:, 2 * D + lo:2 * D + lo + DH].astype(jnp.bfloat16)    # (S, DH)
        # Contract on the shared last dim -> no explicit transpose of kh.
        scores = jax.lax.dot_general(
            qh, kh, (((1,), (1,)), ((), ())),
            preferred_element_type=jnp.float32) + bias                  # (S, S) f32
        m = jnp.max(scores, axis=-1, keepdims=True)
        p = jnp.exp(scores - m)
        p = p * pl.reciprocal(jnp.sum(p, axis=-1, keepdims=True), approx=True)
        ctx_parts.append(jnp.dot(p.astype(jnp.bfloat16), vh,
                                 preferred_element_type=jnp.float32))   # (S, DH)

    # Stack per-head contexts into one lane-dense (S, D) slab and do a single
    # K=D output-projection matmul (no serialized per-head K=DH accumulation).
    ctx = jnp.concatenate(ctx_parts, axis=-1)                           # (S, D) f32
    attn = jnp.dot(ctx.astype(jnp.bfloat16), wo_ref[...],
                   preferred_element_type=jnp.float32) + bo_ref[...]
    out = attn + x                  # dropout(context) + inputs (dropout = id)

    # ---- position-wise feed-forward --------------------------------------
    h2 = _layernorm(out, ln2g_ref[...], ln2b_ref[...])
    inter = jnp.maximum(
        jnp.dot(h2.astype(jnp.bfloat16), w1_ref[...],
                preferred_element_type=jnp.float32) + b1_ref[...],
        0.0)                                                            # (S, DFF) f32
    y = jnp.dot(inter.astype(jnp.bfloat16), w2_ref[...],
                preferred_element_type=jnp.float32) + b2_ref[...]
    o_ref[...] = y + out


def prepare_params(params):
    """One-time parameter prep: fuse QKV weights and cast matmul weights to bf16.

    Done once at parameter-load time so the fused-QKV / bf16-weight claims are
    actually zero-cost on the per-call path.
    """
    (ln1g, ln1b, wq, bq, wk, bk, wv, bv, wo, bo,
     ln2g, ln2b, w1, b1, w2, b2) = params
    wqkv = jnp.concatenate([wq, wk, wv], axis=1).astype(jnp.bfloat16)   # (D, 3D)
    bqkv = jnp.concatenate([bq, bk, bv], axis=1)                        # (1, 3D) f32
    return (ln1g, ln1b, wqkv, bqkv,
            wo.astype(jnp.bfloat16), bo,
            ln2g, ln2b,
            w1.astype(jnp.bfloat16), b1,
            w2.astype(jnp.bfloat16), b2)


def transformer_encoder_layer(x, lengths, prepped):
    """x: (B, S, D) f32, lengths: (B,) int32 valid key lengths. -> (B, S, D) f32."""
    (ln1g, ln1b, wqkv, bqkv, wo, bo, ln2g, ln2b, w1, b1, w2, b2) = prepped

    x_flat = x.reshape(BS, D)

    # Per-batch row tile; weights pinned in VMEM via a constant index_map.
    row_spec = pl.BlockSpec((S, D), lambda b, lens: (b, 0))
    pinned = lambda shape: pl.BlockSpec(shape, lambda b, lens: (0, 0))

    flops = B * (2 * S * D * 3 * D            # fused QKV projection
                 + 2 * H * S * S * DH * 2     # scores + PV
                 + 2 * S * D * D              # output projection
                 + 2 * S * D * DFF * 2)       # FFN
    bytes_accessed = (4 * 2 * BS * D + 4 * B
                      + 2 * (3 * D * D + D * D + 2 * D * DFF)   # bf16 weights
                      + 4 * (3 * D + D + DFF + D + 4 * D))      # f32 biases / LN
    cost = pl.CostEstimate(flops=flops,
                           transcendentals=B * H * S * S + 4 * BS,
                           bytes_accessed=bytes_accessed)

    out_flat = pl.pallas_call(
        encoder_layer_kernel,
        out_shape=jax.ShapeDtypeStruct((BS, D), jnp.float32),
        grid_spec=pltpu.PrefetchScalarGridSpec(
            num_scalar_prefetch=1,            # lengths -> SMEM
            grid=(B,),
            in_specs=[
                row_spec,                     # x
                pinned((1, D)), pinned((1, D)),          # ln1 gamma / beta
                pinned((D, 3 * D)), pinned((1, 3 * D)),  # wqkv / bqkv
                pinned((D, D)), pinned((1, D)),          # wo / bo
                pinned((1, D)), pinned((1, D)),          # ln2 gamma / beta
                pinned((D, DFF)), pinned((1, DFF)),      # w1 / b1
                pinned((DFF, D)), pinned((1, D)),        # w2 / b2
            ],
            out_specs=row_spec,
        ),
        compiler_params=pltpu.CompilerParams(
            dimension_semantics=("parallel",),
            vmem_limit_bytes=32 * 1024 * 1024),
        cost_estimate=cost,
    )(lengths, x_flat, ln1g, ln1b, wqkv, bqkv, wo, bo,
      ln2g, ln2b, w1, b1, w2, b2)

    return out_flat.reshape(B, S, D)


# ----------------------------- pure-JAX reference ----------------------------
def _ref_layernorm(x, g, b):
    mean = jnp.mean(x, axis=-1, keepdims=True)
    var = jnp.mean((x - mean) ** 2, axis=-1, keepdims=True)
    return (x - mean) / jnp.sqrt(var + EPS) * g + b


def reference(x, mask, params):
    (ln1g, ln1b, wq, bq, wk, bk, wv, bv, wo, bo,
     ln2g, ln2b, w1, b1, w2, b2) = params
    h = _ref_layernorm(x, ln1g, ln1b)                                   # (B,S,D)
    q = h @ wq + bq
    k = h @ wk + bk
    v = h @ wv + bv
    qh = q.reshape(B, S, H, DH).transpose(0, 2, 1, 3) / jnp.sqrt(jnp.float32(DH))
    kh = k.reshape(B, S, H, DH).transpose(0, 2, 1, 3)
    vh = v.reshape(B, S, H, DH).transpose(0, 2, 1, 3)
    scores = jnp.einsum("bhqd,bhkd->bhqk", qh, kh)
    scores = jnp.where(mask[:, None, :, :] != 0, NEG, scores)
    p = jax.nn.softmax(scores, axis=-1)
    ctx = jnp.einsum("bhqk,bhkd->bhqd", p, vh).transpose(0, 2, 1, 3).reshape(B, S, D)
    out = ctx @ wo + bo + x
    h2 = _ref_layernorm(out, ln2g, ln2b)
    return jnp.maximum(h2 @ w1 + b1, 0.0) @ w2 + b2 + out


# ----------------------------- main -------------------------------------------
if __name__ == "__main__":
    key = jax.random.PRNGKey(0)
    keys = jax.random.split(key, 10)

    x = jax.random.normal(keys[0], (B, S, D), jnp.float32)

    # padding mask: batch 0 has full length S, batch 1 has length 5
    lengths = jnp.array([S, 5], dtype=jnp.int32)
    key_pos = jnp.arange(S)[None, None, :]                        # (1,1,S)
    mask = (key_pos >= lengths[:, None, None]).astype(jnp.int32)  # (B,1,S)
    mask = jnp.broadcast_to(mask, (B, S, S)).astype(jnp.int32)

    def w(k, shape, scale=0.02):
        return (scale * jax.random.normal(k, shape)).astype(jnp.float32)

    params = (
        jnp.ones((1, D), jnp.float32),            # ln1 gamma
        jnp.zeros((1, D), jnp.float32),           # ln1 beta
        w(keys[1], (D, D)), jnp.zeros((1, D), jnp.float32),      # wq, bq
        w(keys[2], (D, D)), jnp.zeros((1, D), jnp.float32),      # wk, bk
        w(keys[3], (D, D)), jnp.zeros((1, D), jnp.float32),      # wv, bv
        w(keys[4], (D, D)), jnp.zeros((1, D), jnp.float32),      # wo, bo
        jnp.ones((1, D), jnp.float32),            # ln2 gamma
        jnp.zeros((1, D), jnp.float32),           # ln2 beta
        w(keys[5], (D, DFF)), jnp.zeros((1, DFF), jnp.float32),  # w1, b1
        w(keys[6], (DFF, D)), jnp.zeros((1, D), jnp.float32),    # w2, b2
    )

    prepped = prepare_params(params)   # one-time: fused QKV + bf16 weights

    y = jax.block_until_ready(transformer_encoder_layer(x, lengths, prepped))
    y_ref = jax.block_until_ready(reference(x, mask, params))

    # Kernel feeds the MXU bf16 operands (f32 accumulation) while the reference
    # is pure f32, so a bf16-appropriate tolerance is used.
    np.testing.assert_allclose(np.asarray(y), np.asarray(y_ref), rtol=2e-2, atol=2e-2)

    print("KERNEL_OK")
</pallas_src>

<mosaic_0001>
module attributes {stable_mosaic.version = 11 : i64} {
  func.func @encoder_layer_kernel(%arg0: i32, %arg1: memref<2xi32, #tpu.memory_space<smem>>, %arg2: memref<8x128xf32, #tpu.memory_space<vmem>>, %arg3: memref<1x128xf32, #tpu.memory_space<vmem>>, %arg4: memref<1x128xf32, #tpu.memory_space<vmem>>, %arg5: memref<128x384xbf16, #tpu.memory_space<vmem>>, %arg6: memref<1x384xf32, #tpu.memory_space<vmem>>, %arg7: memref<128x128xbf16, #tpu.memory_space<vmem>>, %arg8: memref<1x128xf32, #tpu.memory_space<vmem>>, %arg9: memref<1x128xf32, #tpu.memory_space<vmem>>, %arg10: memref<1x128xf32, #tpu.memory_space<vmem>>, %arg11: memref<128x256xbf16, #tpu.memory_space<vmem>>, %arg12: memref<1x256xf32, #tpu.memory_space<vmem>>, %arg13: memref<256x128xbf16, #tpu.memory_space<vmem>>, %arg14: memref<1x128xf32, #tpu.memory_space<vmem>>, %arg15: memref<8x128xf32, #tpu.memory_space<vmem>>) attributes {dimension_semantics = [#tpu.dimension_semantics<parallel>], iteration_bounds = array<i64: 2>, scalar_prefetch = 1 : i64, scratch_operands = 0 : i64, tpu.core_type = #tpu.core_type<tc>, window_params = [{transform_indices = @transform_0, window_bounds = array<i64: 8, 128>}, {pipeline_mode = #tpu.pipeline_mode<synchronous>, transform_indices = @transform_1, window_bounds = array<i64: 1, 128>}, {pipeline_mode = #tpu.pipeline_mode<synchronous>, transform_indices = @transform_2, window_bounds = array<i64: 1, 128>}, {pipeline_mode = #tpu.pipeline_mode<synchronous>, transform_indices = @transform_3, window_bounds = array<i64: 128, 384>}, {pipeline_mode = #tpu.pipeline_mode<synchronous>, transform_indices = @transform_4, window_bounds = array<i64: 1, 384>}, {pipeline_mode = #tpu.pipeline_mode<synchronous>, transform_indices = @transform_5, window_bounds = array<i64: 128, 128>}, {pipeline_mode = #tpu.pipeline_mode<synchronous>, transform_indices = @transform_6, window_bounds = array<i64: 1, 128>}, {pipeline_mode = #tpu.pipeline_mode<synchronous>, transform_indices = @transform_7, window_bounds = array<i64: 1, 128>}, {pipeline_mode = #tpu.pipeline_mode<synchronous>, transform_indices = @transform_8, window_bounds = array<i64: 1, 128>}, {pipeline_mode = #tpu.pipeline_mode<synchronous>, transform_indices = @transform_9, window_bounds = array<i64: 128, 256>}, {pipeline_mode = #tpu.pipeline_mode<synchronous>, transform_indices = @transform_10, window_bounds = array<i64: 1, 256>}, {pipeline_mode = #tpu.pipeline_mode<synchronous>, transform_indices = @transform_11, window_bounds = array<i64: 256, 128>}, {pipeline_mode = #tpu.pipeline_mode<synchronous>, transform_indices = @transform_12, window_bounds = array<i64: 1, 128>}, {transform_indices = @transform_13, window_bounds = array<i64: 8, 128>}]} {
    %c0 = arith.constant 0 : index
    %c0_0 = arith.constant 0 : index
    %0 = vector.load %arg2[%c0, %c0_0] : memref<8x128xf32, #tpu.memory_space<vmem>>, vector<8x128xf32>
    %1 = tpu.iota {dimensions = array<i32: 1>} : vector<8x8xi32>
    %2 = arith.index_cast %arg0 : i32 to index
    %3 = memref.load %arg1[%2] : memref<2xi32, #tpu.memory_space<smem>>
    %4 = vector.broadcast %3 : i32 to vector<8x8xi32>
    %5 = arith.cmpi sge, %1, %4 : vector<8x8xi32>
    %cst = arith.constant -9.99999984E+17 : f32
    %cst_1 = arith.constant 0.000000e+00 : f32
    %6 = vector.broadcast %cst : f32 to vector<8x8xf32>
    %7 = vector.broadcast %cst_1 : f32 to vector<8x8xf32>
    %8 = arith.select %5, %6, %7 : vector<8x8xi1>, vector<8x8xf32>
    %c0_2 = arith.constant 0 : index
    %c0_3 = arith.constant 0 : index
    %9 = vector.load %arg3[%c0_2, %c0_3] : memref<1x128xf32, #tpu.memory_space<vmem>>, vector<1x128xf32>
    %c0_4 = arith.constant 0 : index
    %c0_5 = arith.constant 0 : index
    %10 = vector.load %arg4[%c0_4, %c0_5] : memref<1x128xf32, #tpu.memory_space<vmem>>, vector<1x128xf32>
    %cst_6 = arith.constant dense<0.000000e+00> : vector<8xf32>
    %11 = vector.multi_reduction <add>, %0, %cst_6 [1] : vector<8x128xf32> to vector<8xf32>
    %12 = vector.shape_cast %11 : vector<8xf32> to vector<8x1xf32>
    %13 = arith.mulf %0, %0 : vector<8x128xf32>
    %cst_7 = arith.constant dense<0.000000e+00> : vector<8xf32>
    %14 = vector.multi_reduction <add>, %13, %cst_7 [1] : vector<8x128xf32> to vector<8xf32>
    %15 = vector.shape_cast %14 : vector<8xf32> to vector<8x1xf32>
    %cst_8 = arith.constant 7.812500e-03 : f32
    %16 = vector.broadcast %cst_8 : f32 to vector<8x1xf32>
    %17 = arith.mulf %12, %16 : vector<8x1xf32>
    %cst_9 = arith.constant 7.812500e-03 : f32
    %18 = vector.broadcast %cst_9 : f32 to vector<8x1xf32>
    %19 = arith.mulf %15, %18 : vector<8x1xf32>
    %20 = arith.mulf %17, %17 : vector<8x1xf32>
    %21 = arith.subf %19, %20 : vector<8x1xf32>
    %22 = vector.broadcast %17 : vector<8x1xf32> to vector<8x128xf32>
    %23 = arith.subf %0, %22 : vector<8x128xf32>
    %cst_10 = arith.constant 9.99999997E-7 : f32
    %24 = vector.broadcast %cst_10 : f32 to vector<8x1xf32>
    %25 = arith.addf %21, %24 : vector<8x1xf32>
    %26 = math.rsqrt %25 : vector<8x1xf32>
    %27 = vector.broadcast %26 : vector<8x1xf32> to vector<8x128xf32>
    %28 = arith.mulf %23, %27 : vector<8x128xf32>
    %29 = vector.broadcast %9 : vector<1x128xf32> to vector<8x128xf32>
    %30 = arith.mulf %28, %29 : vector<8x128xf32>
    %31 = vector.broadcast %10 : vector<1x128xf32> to vector<8x128xf32>
    %32 = arith.addf %30, %31 : vector<8x128xf32>
    %33 = arith.truncf %32 : vector<8x128xf32> to vector<8x128xbf16>
    %c0_11 = arith.constant 0 : index
    %c0_12 = arith.constant 0 : index
    %34 = vector.load %arg5[%c0_11, %c0_12] : memref<128x384xbf16, #tpu.memory_space<vmem>>, vector<128x384xbf16>
    %cst_13 = arith.constant dense<0.000000e+00> : vector<8x384xf32>
    %35 = tpu.matmul %33, %34, %cst_13 {dimension_numbers = #tpu.dot_dimension_numbers<[1], [0], [0], [1], [0, 0, 1, 1], [], []>} : vector<8x128xbf16>, vector<128x384xbf16>, vector<8x384xf32> -> vector<8x384xf32>
    %c0_14 = arith.constant 0 : index
    %c0_15 = arith.constant 0 : index
    %36 = vector.load %arg6[%c0_14, %c0_15] : memref<1x384xf32, #tpu.memory_space<vmem>>, vector<1x384xf32>
    %37 = vector.broadcast %36 : vector<1x384xf32> to vector<8x384xf32>
    %38 = arith.addf %35, %37 : vector<8x384xf32>
    %cst_16 = arith.constant 3.200000e+01 : f32
    %39 = math.sqrt %cst_16 : f32
    %cst_17 = arith.constant 1.000000e+00 : f32
    %40 = arith.divf %cst_17, %39 : f32
    %41 = vector.extract_strided_slice %38 {offsets = [0, 0], sizes = [8, 32], strides = [1, 1]} : vector<8x384xf32> to vector<8x32xf32>
    %42 = vector.broadcast %40 : f32 to vector<8x32xf32>
    %43 = arith.mulf %41, %42 : vector<8x32xf32>
    %44 = arith.truncf %43 : vector<8x32xf32> to vector<8x32xbf16>
    %45 = vector.extract_strided_slice %38 {offsets = [0, 128], sizes = [8, 32], strides = [1, 1]} : vector<8x384xf32> to vector<8x32xf32>
    %46 = arith.truncf %45 : vector<8x32xf32> to vector<8x32xbf16>
    %47 = vector.extract_strided_slice %38 {offsets = [0, 256], sizes = [8, 32], strides = [1, 1]} : vector<8x384xf32> to vector<8x32xf32>
    %48 = arith.truncf %47 : vector<8x32xf32> to vector<8x32xbf16>
    %cst_18 = arith.constant dense<0.000000e+00> : vector<8x8xf32>
    %49 = tpu.matmul %44, %46, %cst_18 {dimension_numbers = #tpu.dot_dimension_numbers<[1], [1], [0], [0], [0, 0, 1, 0], [], []>} : vector<8x32xbf16>, vector<8x32xbf16>, vector<8x8xf32> -> vector<8x8xf32>
    %50 = arith.addf %49, %8 : vector<8x8xf32>
    %cst_19 = arith.constant dense<0xFF800000> : vector<8xf32>
    %51 = vector.multi_reduction <maximumf>, %50, %cst_19 [1] : vector<8x8xf32> to vector<8xf32>
    %52 = vector.shape_cast %51 : vector<8xf32> to vector<8x1xf32>
    %53 = vector.broadcast %52 : vector<8x1xf32> to vector<8x8xf32>
    %54 = arith.subf %50, %53 : vector<8x8xf32>
    %55 = math.exp %54 : vector<8x8xf32>
    %cst_20 = arith.constant dense<0.000000e+00> : vector<8xf32>
    %56 = vector.multi_reduction <add>, %55, %cst_20 [1] : vector<8x8xf32> to vector<8xf32>
    %57 = vector.shape_cast %56 : vector<8xf32> to vector<8x1xf32>
    %58 = tpu.reciprocal %57 {approx = true} : vector<8x1xf32> -> vector<8x1xf32>
    %59 = vector.broadcast %58 : vector<8x1xf32> to vector<8x8xf32>
    %60 = arith.mulf %55, %59 : vector<8x8xf32>
    %61 = arith.truncf %60 : vector<8x8xf32> to vector<8x8xbf16>
    %cst_21 = arith.constant dense<0.000000e+00> : vector<8x32xf32>
    %62 = tpu.matmul %61, %48, %cst_21 {dimension_numbers = #tpu.dot_dimension_numbers<[1], [0], [0], [1], [0, 0, 1, 1], [], []>} : vector<8x8xbf16>, vector<8x32xbf16>, vector<8x32xf32> -> vector<8x32xf32>
    %63 = vector.extract_strided_slice %38 {offsets = [0, 32], sizes = [8, 32], strides = [1, 1]} : vector<8x384xf32> to vector<8x32xf32>
    %64 = vector.broadcast %40 : f32 to vector<8x32xf32>
    %65 = arith.mulf %63, %64 : vector<8x32xf32>
    %66 = arith.truncf %65 : vector<8x32xf32> to vector<8x32xbf16>
    %67 = vector.extract_strided_slice %38 {offsets = [0, 160], sizes = [8, 32], strides = [1, 1]} : vector<8x384xf32> to vector<8x32xf32>
    %68 = arith.truncf %67 : vector<8x32xf32> to vector<8x32xbf16>
    %69 = vector.extract_strided_slice %38 {offsets = [0, 288], sizes = [8, 32], strides = [1, 1]} : vector<8x384xf32> to vector<8x32xf32>
    %70 = arith.truncf %69 : vector<8x32xf32> to vector<8x32xbf16>
    %cst_22 = arith.constant dense<0.000000e+00> : vector<8x8xf32>
    %71 = tpu.matmul %66, %68, %cst_22 {dimension_numbers = #tpu.dot_dimension_numbers<[1], [1], [0], [0], [0, 0, 1, 0], [], []>} : vector<8x32xbf16>, vector<8x32xbf16>, vector<8x8xf32> -> vector<8x8xf32>
    %72 = arith.addf %71, %8 : vector<8x8xf32>
    %cst_23 = arith.constant dense<0xFF800000> : vector<8xf32>
    %73 = vector.multi_reduction <maximumf>, %72, %cst_23 [1] : vector<8x8xf32> to vector<8xf32>
    %74 = vector.shape_cast %73 : vector<8xf32> to vector<8x1xf32>
    %75 = vector.broadcast %74 : vector<8x1xf32> to vector<8x8xf32>
    %76 = arith.subf %72, %75 : vector<8x8xf32>
    %77 = math.exp %76 : vector<8x8xf32>
    %cst_24 = arith.constant dense<0.000000e+00> : vector<8xf32>
    %78 = vector.multi_reduction <add>, %77, %cst_24 [1] : vector<8x8xf32> to vector<8xf32>
    %79 = vector.shape_cast %78 : vector<8xf32> to vector<8x1xf32>
    %80 = tpu.reciprocal %79 {approx = true} : vector<8x1xf32> -> vector<8x1xf32>
    %81 = vector.broadcast %80 : vector<8x1xf32> to vector<8x8xf32>
    %82 = arith.mulf %77, %81 : vector<8x8xf32>
    %83 = arith.truncf %82 : vector<8x8xf32> to vector<8x8xbf16>
    %cst_25 = arith.constant dense<0.000000e+00> : vector<8x32xf32>
    %84 = tpu.matmul %83, %70, %cst_25 {dimension_numbers = #tpu.dot_dimension_numbers<[1], [0], [0], [1], [0, 0, 1, 1], [], []>} : vector<8x8xbf16>, vector<8x32xbf16>, vector<8x32xf32> -> vector<8x32xf32>
    %85 = vector.extract_strided_slice %38 {offsets = [0, 64], sizes = [8, 32], strides = [1, 1]} : vector<8x384xf32> to vector<8x32xf32>
    %86 = vector.broadcast %40 : f32 to vector<8x32xf32>
    %87 = arith.mulf %85, %86 : vector<8x32xf32>
    %88 = arith.truncf %87 : vector<8x32xf32> to vector<8x32xbf16>
    %89 = vector.extract_strided_slice %38 {offsets = [0, 192], sizes = [8, 32], strides = [1, 1]} : vector<8x384xf32> to vector<8x32xf32>
    %90 = arith.truncf %89 : vector<8x32xf32> to vector<8x32xbf16>
    %91 = vector.extract_strided_slice %38 {offsets = [0, 320], sizes = [8, 32], strides = [1, 1]} : vector<8x384xf32> to vector<8x32xf32>
    %92 = arith.truncf %91 : vector<8x32xf32> to vector<8x32xbf16>
    %cst_26 = arith.constant dense<0.000000e+00> : vector<8x8xf32>
    %93 = tpu.matmul %88, %90, %cst_26 {dimension_numbers = #tpu.dot_dimension_numbers<[1], [1], [0], [0], [0, 0, 1, 0], [], []>} : vector<8x32xbf16>, vector<8x32xbf16>, vector<8x8xf32> -> vector<8x8xf32>
    %94 = arith.addf %93, %8 : vector<8x8xf32>
    %cst_27 = arith.constant dense<0xFF800000> : vector<8xf32>
    %95 = vector.multi_reduction <maximumf>, %94, %cst_27 [1] : vector<8x8xf32> to vector<8xf32>
    %96 = vector.shape_cast %95 : vector<8xf32> to vector<8x1xf32>
    %97 = vector.broadcast %96 : vector<8x1xf32> to vector<8x8xf32>
    %98 = arith.subf %94, %97 : vector<8x8xf32>
    %99 = math.exp %98 : vector<8x8xf32>
    %cst_28 = arith.constant dense<0.000000e+00> : vector<8xf32>
    %100 = vector.multi_reduction <add>, %99, %cst_28 [1] : vector<8x8xf32> to vector<8xf32>
    %101 = vector.shape_cast %100 : vector<8xf32> to vector<8x1xf32>
    %102 = tpu.reciprocal %101 {approx = true} : vector<8x1xf32> -> vector<8x1xf32>
    %103 = vector.broadcast %102 : vector<8x1xf32> to vector<8x8xf32>
    %104 = arith.mulf %99, %103 : vector<8x8xf32>
    %105 = arith.truncf %104 : vector<8x8xf32> to vector<8x8xbf16>
    %cst_29 = arith.constant dense<0.000000e+00> : vector<8x32xf32>
    %106 = tpu.matmul %105, %92, %cst_29 {dimension_numbers = #tpu.dot_dimension_numbers<[1], [0], [0], [1], [0, 0, 1, 1], [], []>} : vector<8x8xbf16>, vector<8x32xbf16>, vector<8x32xf32> -> vector<8x32xf32>
    %107 = vector.extract_strided_slice %38 {offsets = [0, 96], sizes = [8, 32], strides = [1, 1]} : vector<8x384xf32> to vector<8x32xf32>
    %108 = vector.broadcast %40 : f32 to vector<8x32xf32>
    %109 = arith.mulf %107, %108 : vector<8x32xf32>
    %110 = arith.truncf %109 : vector<8x32xf32> to vector<8x32xbf16>
    %111 = vector.extract_strided_slice %38 {offsets = [0, 224], sizes = [8, 32], strides = [1, 1]} : vector<8x384xf32> to vector<8x32xf32>
    %112 = arith.truncf %111 : vector<8x32xf32> to vector<8x32xbf16>
    %113 = vector.extract_strided_slice %38 {offsets = [0, 352], sizes = [8, 32], strides = [1, 1]} : vector<8x384xf32> to vector<8x32xf32>
    %114 = arith.truncf %113 : vector<8x32xf32> to vector<8x32xbf16>
    %cst_30 = arith.constant dense<0.000000e+00> : vector<8x8xf32>
    %115 = tpu.matmul %110, %112, %cst_30 {dimension_numbers = #tpu.dot_dimension_numbers<[1], [1], [0], [0], [0, 0, 1, 0], [], []>} : vector<8x32xbf16>, vector<8x32xbf16>, vector<8x8xf32> -> vector<8x8xf32>
    %116 = arith.addf %115, %8 : vector<8x8xf32>
    %cst_31 = arith.constant dense<0xFF800000> : vector<8xf32>
    %117 = vector.multi_reduction <maximumf>, %116, %cst_31 [1] : vector<8x8xf32> to vector<8xf32>
    %118 = vector.shape_cast %117 : vector<8xf32> to vector<8x1xf32>
    %119 = vector.broadcast %118 : vector<8x1xf32> to vector<8x8xf32>
    %120 = arith.subf %116, %119 : vector<8x8xf32>
    %121 = math.exp %120 : vector<8x8xf32>
    %cst_32 = arith.constant dense<0.000000e+00> : vector<8xf32>
    %122 = vector.multi_reduction <add>, %121, %cst_32 [1] : vector<8x8xf32> to vector<8xf32>
    %123 = vector.shape_cast %122 : vector<8xf32> to vector<8x1xf32>
    %124 = tpu.reciprocal %123 {approx = true} : vector<8x1xf32> -> vector<8x1xf32>
    %125 = vector.broadcast %124 : vector<8x1xf32> to vector<8x8xf32>
    %126 = arith.mulf %121, %125 : vector<8x8xf32>
    %127 = arith.truncf %126 : vector<8x8xf32> to vector<8x8xbf16>
    %cst_33 = arith.constant dense<0.000000e+00> : vector<8x32xf32>
    %128 = tpu.matmul %127, %114, %cst_33 {dimension_numbers = #tpu.dot_dimension_numbers<[1], [0], [0], [1], [0, 0, 1, 1], [], []>} : vector<8x8xbf16>, vector<8x32xbf16>, vector<8x32xf32> -> vector<8x32xf32>
    %129 = tpu.concatenate %62, %84, %106, %128 in 1 : vector<8x32xf32>, vector<8x32xf32>, vector<8x32xf32>, vector<8x32xf32> -> vector<8x128xf32>
    %130 = arith.truncf %129 : vector<8x128xf32> to vector<8x128xbf16>
    %c0_34 = arith.constant 0 : index
    %c0_35 = arith.constant 0 : index
    %131 = vector.load %arg7[%c0_34, %c0_35] : memref<128x128xbf16, #tpu.memory_space<vmem>>, vector<128x128xbf16>
    %cst_36 = arith.constant dense<0.000000e+00> : vector<8x128xf32>
    %132 = tpu.matmul %130, %131, %cst_36 {dimension_numbers = #tpu.dot_dimension_numbers<[1], [0], [0], [1], [0, 0, 1, 1], [], []>} : vector<8x128xbf16>, vector<128x128xbf16>, vector<8x128xf32> -> vector<8x128xf32>
    %c0_37 = arith.constant 0 : index
    %c0_38 = arith.constant 0 : index
    %133 = vector.load %arg8[%c0_37, %c0_38] : memref<1x128xf32, #tpu.memory_space<vmem>>, vector<1x128xf32>
    %134 = vector.broadcast %133 : vector<1x128xf32> to vector<8x128xf32>
    %135 = arith.addf %132, %134 : vector<8x128xf32>
    %136 = arith.addf %135, %0 : vector<8x128xf32>
    %c0_39 = arith.constant 0 : index
    %c0_40 = arith.constant 0 : index
    %137 = vector.load %arg9[%c0_39, %c0_40] : memref<1x128xf32, #tpu.memory_space<vmem>>, vector<1x128xf32>
    %c0_41 = arith.constant 0 : index
    %c0_42 = arith.constant 0 : index
    %138 = vector.load %arg10[%c0_41, %c0_42] : memref<1x128xf32, #tpu.memory_space<vmem>>, vector<1x128xf32>
    %cst_43 = arith.constant dense<0.000000e+00> : vector<8xf32>
    %139 = vector.multi_reduction <add>, %136, %cst_43 [1] : vector<8x128xf32> to vector<8xf32>
    %140 = vector.shape_cast %139 : vector<8xf32> to vector<8x1xf32>
    %141 = arith.mulf %136, %136 : vector<8x128xf32>
    %cst_44 = arith.constant dense<0.000000e+00> : vector<8xf32>
    %142 = vector.multi_reduction <add>, %141, %cst_44 [1] : vector<8x128xf32> to vector<8xf32>
    %143 = vector.shape_cast %142 : vector<8xf32> to vector<8x1xf32>
    %cst_45 = arith.constant 7.812500e-03 : f32
    %144 = vector.broadcast %cst_45 : f32 to vector<8x1xf32>
    %145 = arith.mulf %140, %144 : vector<8x1xf32>
    %cst_46 = arith.constant 7.812500e-03 : f32
    %146 = vector.broadcast %cst_46 : f32 to vector<8x1xf32>
    %147 = arith.mulf %143, %146 : vector<8x1xf32>
    %148 = arith.mulf %145, %145 : vector<8x1xf32>
    %149 = arith.subf %147, %148 : vector<8x1xf32>
    %150 = vector.broadcast %145 : vector<8x1xf32> to vector<8x128xf32>
    %151 = arith.subf %136, %150 : vector<8x128xf32>
    %cst_47 = arith.constant 9.99999997E-7 : f32
    %152 = vector.broadcast %cst_47 : f32 to vector<8x1xf32>
    %153 = arith.addf %149, %152 : vector<8x1xf32>
    %154 = math.rsqrt %153 : vector<8x1xf32>
    %155 = vector.broadcast %154 : vector<8x1xf32> to vector<8x128xf32>
    %156 = arith.mulf %151, %155 : vector<8x128xf32>
    %157 = vector.broadcast %137 : vector<1x128xf32> to vector<8x128xf32>
    %158 = arith.mulf %156, %157 : vector<8x128xf32>
    %159 = vector.broadcast %138 : vector<1x128xf32> to vector<8x128xf32>
    %160 = arith.addf %158, %159 : vector<8x128xf32>
    %161 = arith.truncf %160 : vector<8x128xf32> to vector<8x128xbf16>
    %c0_48 = arith.constant 0 : index
    %c0_49 = arith.constant 0 : index
    %162 = vector.load %arg11[%c0_48, %c0_49] : memref<128x256xbf16, #tpu.memory_space<vmem>>, vector<128x256xbf16>
    %cst_50 = arith.constant dense<0.000000e+00> : vector<8x256xf32>
    %163 = tpu.matmul %161, %162, %cst_50 {dimension_numbers = #tpu.dot_dimension_numbers<[1], [0], [0], [1], [0, 0, 1, 1], [], []>} : vector<8x128xbf16>, vector<128x256xbf16>, vector<8x256xf32> -> vector<8x256xf32>
    %c0_51 = arith.constant 0 : index
    %c0_52 = arith.constant 0 : index
    %164 = vector.load %arg12[%c0_51, %c0_52] : memref<1x256xf32, #tpu.memory_space<vmem>>, vector<1x256xf32>
    %165 = vector.broadcast %164 : vector<1x256xf32> to vector<8x256xf32>
    %166 = arith.addf %163, %165 : vector<8x256xf32>
    %cst_53 = arith.constant 0.000000e+00 : f32
    %167 = vector.broadcast %cst_53 : f32 to vector<8x256xf32>
    %168 = arith.maximumf %166, %167 : vector<8x256xf32>
    %169 = arith.truncf %168 : vector<8x256xf32> to vector<8x256xbf16>
    %c0_54 = arith.constant 0 : index
    %c0_55 = arith.constant 0 : index
    %170 = vector.load %arg13[%c0_54, %c0_55] : memref<256x128xbf16, #tpu.memory_space<vmem>>, vector<256x128xbf16>
    %cst_56 = arith.constant dense<0.000000e+00> : vector<8x128xf32>
    %171 = tpu.matmul %169, %170, %cst_56 {dimension_numbers = #tpu.dot_dimension_numbers<[1], [0], [0], [1], [0, 0, 1, 1], [], []>} : vector<8x256xbf16>, vector<256x128xbf16>, vector<8x128xf32> -> vector<8x128xf32>
    %c0_57 = arith.constant 0 : index
    %c0_58 = arith.constant 0 : index
    %172 = vector.load %arg14[%c0_57, %c0_58] : memref<1x128xf32, #tpu.memory_space<vmem>>, vector<1x128xf32>
    %173 = vector.broadcast %172 : vector<1x128xf32> to vector<8x128xf32>
    %174 = arith.addf %171, %173 : vector<8x128xf32>
    %175 = arith.addf %174, %136 : vector<8x128xf32>
    %c0_59 = arith.constant 0 : index
    %c0_60 = arith.constant 0 : index
    %176 = vector.load %arg15[%c0_59, %c0_60] : memref<8x128xf32, #tpu.memory_space<vmem>>, vector<8x128xf32>
    tpu.vector_store %arg15[%c0_59, %c0_60], %175 {strides = array<i32>} : memref<8x128xf32, #tpu.memory_space<vmem>>, vector<8x128xf32>,
    return
  }
  func.func @transform_0(%arg0: i32, %arg1: memref<2xi32, #tpu.memory_space<smem>>) -> (i32, i32) {
    %c0_i32 = arith.constant 0 : i32
    %c0_i32_0 = arith.constant 0 : i32
    return %arg0, %c0_i32 : i32, i32
  }
  func.func @transform_1(%arg0: i32, %arg1: memref<2xi32, #tpu.memory_space<smem>>) -> (i32, i32) {
    %c0_i32 = arith.constant 0 : i32
    %c0_i32_0 = arith.constant 0 : i32
    %c0_i32_1 = arith.constant 0 : i32
    return %c0_i32, %c0_i32_0 : i32, i32
  }
  func.func @transform_2(%arg0: i32, %arg1: memref<2xi32, #tpu.memory_space<smem>>) -> (i32, i32) {
    %c0_i32 = arith.constant 0 : i32
    %c0_i32_0 = arith.constant 0 : i32
    %c0_i32_1 = arith.constant 0 : i32
    return %c0_i32, %c0_i32_0 : i32, i32
  }
  func.func @transform_3(%arg0: i32, %arg1: memref<2xi32, #tpu.memory_space<smem>>) -> (i32, i32) {
    %c0_i32 = arith.constant 0 : i32
    %c0_i32_0 = arith.constant 0 : i32
    %c0_i32_1 = arith.constant 0 : i32
    return %c0_i32, %c0_i32_0 : i32, i32
  }
  func.func @transform_4(%arg0: i32, %arg1: memref<2xi32, #tpu.memory_space<smem>>) -> (i32, i32) {
    %c0_i32 = arith.constant 0 : i32
    %c0_i32_0 = arith.constant 0 : i32
    %c0_i32_1 = arith.constant 0 : i32
    return %c0_i32, %c0_i32_0 : i32, i32
  }
  func.func @transform_5(%arg0: i32, %arg1: memref<2xi32, #tpu.memory_space<smem>>) -> (i32, i32) {
    %c0_i32 = arith.constant 0 : i32
    %c0_i32_0 = arith.constant 0 : i32
    %c0_i32_1 = arith.constant 0 : i32
    return %c0_i32, %c0_i32_0 : i32, i32
  }
  func.func @transform_6(%arg0: i32, %arg1: memref<2xi32, #tpu.memory_space<smem>>) -> (i32, i32) {
    %c0_i32 = arith.constant 0 : i32
    %c0_i32_0 = arith.constant 0 : i32
    %c0_i32_1 = arith.constant 0 : i32
    return %c0_i32, %c0_i32_0 : i32, i32
  }
  func.func @transform_7(%arg0: i32, %arg1: memref<2xi32, #tpu.memory_space<smem>>) -> (i32, i32) {
    %c0_i32 = arith.constant 0 : i32
    %c0_i32_0 = arith.constant 0 : i32
    %c0_i32_1 = arith.constant 0 : i32
    return %c0_i32, %c0_i32_0 : i32, i32
  }
  func.func @transform_8(%arg0: i32, %arg1: memref<2xi32, #tpu.memory_space<smem>>) -> (i32, i32) {
    %c0_i32 = arith.constant 0 : i32
    %c0_i32_0 = arith.constant 0 : i32
    %c0_i32_1 = arith.constant 0 : i32
    return %c0_i32, %c0_i32_0 : i32, i32
  }
  func.func @transform_9(%arg0: i32, %arg1: memref<2xi32, #tpu.memory_space<smem>>) -> (i32, i32) {
    %c0_i32 = arith.constant 0 : i32
    %c0_i32_0 = arith.constant 0 : i32
    %c0_i32_1 = arith.constant 0 : i32
    return %c0_i32, %c0_i32_0 : i32, i32
  }
  func.func @transform_10(%arg0: i32, %arg1: memref<2xi32, #tpu.memory_space<smem>>) -> (i32, i32) {
    %c0_i32 = arith.constant 0 : i32
    %c0_i32_0 = arith.constant 0 : i32
    %c0_i32_1 = arith.constant 0 : i32
    return %c0_i32, %c0_i32_0 : i32, i32
  }
  func.func @transform_11(%arg0: i32, %arg1: memref<2xi32, #tpu.memory_space<smem>>) -> (i32, i32) {
    %c0_i32 = arith.constant 0 : i32
    %c0_i32_0 = arith.constant 0 : i32
    %c0_i32_1 = arith.constant 0 : i32
    return %c0_i32, %c0_i32_0 : i32, i32
  }
  func.func @transform_12(%arg0: i32, %arg1: memref<2xi32, #tpu.memory_space<smem>>) -> (i32, i32) {
    %c0_i32 = arith.constant 0 : i32
    %c0_i32_0 = arith.constant 0 : i32
    %c0_i32_1 = arith.constant 0 : i32
    return %c0_i32, %c0_i32_0 : i32, i32
  }
  func.func @transform_13(%arg0: i32, %arg1: memref<2xi32, #tpu.memory_space<smem>>) -> (i32, i32) {
    %c0_i32 = arith.constant 0 : i32
    %c0_i32_0 = arith.constant 0 : i32
    return %arg0, %c0_i32 : i32, i32
  }
}

</mosaic_0001>

<llo_original>
// kernel: tpu_custom_call.1
$region0: #{tpu_custom_call.1}
  #allocation0 [shape = 'u32[]', space=smem, size = 0x4, offset = 0x4, fixed_abs, tag = 'smem constant byte address 0x4 - core index']
  #allocation1 [shape = 'u32[144,128]{1,0:T(1,128)}', space=vmem, size = 0x12000, scoped, tag = 'internal scratch']
  #allocation2 [shape = 's32[1]{0}', space=sflag, size = 0x4, scoped, tag = 'scoped memory for tpu_custom_call.1']
  #allocation3 [shape = 'u8[512]{0}', space=smem, size = 0x200, scoped, tag = 'prefetched SMEM operand 0']
  %s0 = inlined_call_operand.hbm [shape: s32[2], index: 0, kind: input, shape index: {}]
  %s1 = inlined_call_operand.hbm [shape: f32[16,128], index: 1, kind: input, shape index: {}]
  %s2 = inlined_call_operand.vmem [shape: f32[1,128], index: 2, kind: input, shape index: {}]
  %s3 = inlined_call_operand.vmem [shape: f32[1,128], index: 3, kind: input, shape index: {}]
  %s4 = inlined_call_operand.hbm [shape: bf16[128,384], index: 4, kind: input, shape index: {}]
  %s5 = inlined_call_operand.vmem [shape: f32[1,384], index: 5, kind: input, shape index: {}]
  %s6 = inlined_call_operand.hbm [shape: bf16[128,128], index: 6, kind: input, shape index: {}]
  %s7 = inlined_call_operand.vmem [shape: f32[1,128], index: 7, kind: input, shape index: {}]
  %s8 = inlined_call_operand.vmem [shape: f32[1,128], index: 8, kind: input, shape index: {}]
  %s9 = inlined_call_operand.vmem [shape: f32[1,128], index: 9, kind: input, shape index: {}]
  %s10 = inlined_call_operand.hbm [shape: bf16[128,256], index: 10, kind: input, shape index: {}]
  %s11 = inlined_call_operand.vmem [shape: f32[1,256], index: 11, kind: input, shape index: {}]
  %s12 = inlined_call_operand.hbm [shape: bf16[256,128], index: 12, kind: input, shape index: {}]
  %s13 = inlined_call_operand.vmem [shape: f32[1,128], index: 13, kind: input, shape index: {}]
  %s14 = inlined_call_operand.hbm [shape: f32[16,128], index: 14, kind: output, shape index: {}]
  %s15 = sld [smem:[#allocation0]]
  $region105: #{tpu_custom_call.1} parent=0
    _
  %s17 = ssub.s32 1, %s15
  %s18 = scalar_select 0, %s17, %s15
  %20 = dma.hbm_to_smem %s0, 16, [#allocation3], [#allocation2]
  %21 = dma.done [#allocation2], 16
  %22 = sfence
  $region1: #{tpu_custom_call.1} parent=0
    #allocation4 [shape = 'u8[8192]{0}', space=vmem, size = 0x2000, scoped, tag = 'input window, operand 1']
    #allocation5 [shape = 's32[2]{0}', space=sflag, size = 0x8, scoped, tag = 'scoped memory for tpu_custom_call.1']
    #allocation6 [shape = 's32[2]{0}', space=sflag, size = 0x8, scoped, tag = 'scoped memory for tpu_custom_call.1']
    #allocation7 [shape = 'u8[98304]{0}', space=vmem, size = 0x18000, scoped, tag = 'input window, operand 4, single buffered']
    #allocation8 [shape = 's32[1]{0}', space=sflag, size = 0x4, scoped, tag = 'scoped memory for tpu_custom_call.1']
    #allocation9 [shape = 'u8[32768]{0}', space=vmem, size = 0x8000, scoped, tag = 'input window, operand 6, single buffered']
    #allocation10 [shape = 'u8[65536]{0}', space=vmem, size = 0x10000, scoped, tag = 'input window, operand 10, single buffered']
    #allocation11 [shape = 's32[1]{0}', space=sflag, size = 0x4, scoped, tag = 'scoped memory for tpu_custom_call.1']
    #allocation12 [shape = 'u8[65536]{0}', space=vmem, size = 0x10000, scoped, tag = 'input window, operand 12, single buffered']
    #allocation13 [shape = 'u8[8192]{0}', space=vmem, size = 0x2000, scoped, tag = 'output window, operand 0']
    %23 = vsyncpa [#allocation5], 0
    %s24 = scalar_lea.sflag [#allocation5], 1
    %25 = vsyncpa %s24, 0
    %26 = vsyncpa [#allocation8], 0
    %27 = vsyncpa [#allocation11], 0
    %28 = vsyncpa [#allocation6], 0
    %s29 = scalar_lea.sflag [#allocation6], 1
    %30 = vsyncpa %s29, 0
    loop: start=0, step=1, limit=4
    $region2: #{tpu_custom_call.1} parent=1 // loop_pre_header
      _
    $region3: #{tpu_custom_call.1} parent=1 // loop_header
      %s32 = sphi 0, %s36
      %p33 = scmp.ge.s32.totalorder %s32, 4
      %s42 = sphi 0, %s44
      %s45 = sphi 0, %s42
      %s46 = sphi 0, %s45
      %s62 = sphi 0, %s46
      %s66 = sphi 0, %s66
      %s68 = sphi 0, %s66
      %s69 = sphi 0, %s68
      %s83 = sphi 0, %s69
      %s87 = sphi 0, %s87
      %s89 = sphi 0, %s87
      %s90 = sphi 0, %s89
      %s104 = sphi 0, %s90
      %s108 = sphi 0, %s108
      %s110 = sphi 0, %s108
      %s111 = sphi 0, %s110
      %s125 = sphi 0, %s111
      %s129 = sphi 0, %s129
      %s131 = sphi 0, %s129
      %s132 = sphi 0, %s131
      %s146 = sphi 0, %s132
      %s150 = sphi 0, %s150
      %s152 = sphi 0, %s150
      %s153 = sphi 0, %s152
      %s167 = sphi 0, %s153
      %s171 = sphi 0, %s171
      %s173 = sphi 0, %s171
      %s174 = sphi 0, %s173
      %s188 = sphi 0, %s174
      %s192 = sphi 0, %s192
      %s194 = sphi 0, %s192
      %s195 = sphi 0, %s194
      %s209 = sphi 0, %s195
      %s213 = sphi 0, %s213
      %s215 = sphi 0, %s213
      %s216 = sphi 0, %s215
      %s230 = sphi 0, %s216
      %s234 = sphi 0, %s234
      %s236 = sphi 0, %s234
      %s237 = sphi 0, %s236
      %s251 = sphi 0, %s237
      %s255 = sphi 0, %s255
      %s257 = sphi 0, %s255
      %s258 = sphi 0, %s257
      %s272 = sphi 0, %s258
      %s276 = sphi 0, %s276
      %s278 = sphi 0, %s276
      %s279 = sphi 0, %s278
      %s293 = sphi 0, %s279
      %s297 = sphi 0, %s297
      %s299 = sphi 0, %s297
      %s300 = sphi 0, %s299
      %s314 = sphi 0, %s300
      %s320 = sphi 0, %s322
      %s323 = sphi 0, %s320
      %s324 = sphi 0, %s323
      %s340 = sphi 0, %s324
    $region4: #{tpu_custom_call.1} parent=1 // loop_header_branch
      %35 = sbr.rel (%p33) target = $region8
    $region5: #{tpu_custom_call.1} parent=1 // loop_body
      %s37 = ssub.s32 %s32, 1
      %s38 = ssub.s32 %s32, 2
      %s39 = sadd.s32 %s32, 1
      %s40 = ssub.s32 %s32, %s39
      %p41 = scmp.eq.s32.totalorder %s40, 0
      %s43 = sadd.s32 %s42, 1
      %s44 = scalar_select %p41, %s42, %s43
      %p47 = pneg %p41
      %p48 = scmp.eq.s32.totalorder %s32, 1
      %p49 = por %p47, %p48
      %p50 = scmp.ne.s32.totalorder %s42, %s45
      %p51 = scmp.eq.s32.totalorder %s32, 0
      %p52 = por %p50, %p51
      %p53 = scmp.ne.s32.totalorder %s42, %s45
      %p54 = scmp.eq.s32.totalorder %s37, 1
      %p55 = por %p53, %p54
      %p56 = scmp.ne.s32.totalorder %s45, %s46
      %p57 = scmp.eq.s32.totalorder %s37, 0
      %p58 = por %p56, %p57
      %p59 = scmp.ne.s32.totalorder %s45, %s46
      %p60 = scmp.eq.s32.totalorder %s38, 1
      %p61 = por %p59, %p60
      %p63 = scmp.ne.s32.totalorder %s46, %s62
      %p64 = scmp.eq.s32.totalorder %s38, 0
      %p65 = por %p63, %p64
      %s67 = sadd.s32 %s66, 1
      %p70 = scmp.eq.s32.totalorder %s32, 1
      %p71 = scmp.ne.s32.totalorder %s66, %s68
      %p72 = scmp.eq.s32.totalorder %s32, 0
      %p73 = por %p71, %p72
      %p74 = scmp.ne.s32.totalorder %s66, %s68
      %p75 = scmp.eq.s32.totalorder %s37, 1
      %p76 = por %p74, %p75
      %p77 = scmp.ne.s32.totalorder %s68, %s69
      %p78 = scmp.eq.s32.totalorder %s37, 0
      %p79 = por %p77, %p78
      %p80 = scmp.ne.s32.totalorder %s68, %s69
      %p81 = scmp.eq.s32.totalorder %s38, 1
      %p82 = por %p80, %p81
      %p84 = scmp.ne.s32.totalorder %s69, %s83
      %p85 = scmp.eq.s32.totalorder %s38, 0
      %p86 = por %p84, %p85
      %s88 = sadd.s32 %s87, 1
      %p91 = scmp.eq.s32.totalorder %s32, 1
      %p92 = scmp.ne.s32.totalorder %s87, %s89
      %p93 = scmp.eq.s32.totalorder %s32, 0
      %p94 = por %p92, %p93
      %p95 = scmp.ne.s32.totalorder %s87, %s89
      %p96 = scmp.eq.s32.totalorder %s37, 1
      %p97 = por %p95, %p96
      %p98 = scmp.ne.s32.totalorder %s89, %s90
      %p99 = scmp.eq.s32.totalorder %s37, 0
      %p100 = por %p98, %p99
      %p101 = scmp.ne.s32.totalorder %s89, %s90
      %p102 = scmp.eq.s32.totalorder %s38, 1
      %p103 = por %p101, %p102
      %p105 = scmp.ne.s32.totalorder %s90, %s104
      %p106 = scmp.eq.s32.totalorder %s38, 0
      %p107 = por %p105, %p106
      %s109 = sadd.s32 %s108, 1
      %p112 = scmp.eq.s32.totalorder %s32, 1
      %p113 = scmp.ne.s32.totalorder %s108, %s110
      %p114 = scmp.eq.s32.totalorder %s32, 0
      %p115 = por %p113, %p114
      %p116 = scmp.ne.s32.totalorder %s108, %s110
      %p117 = scmp.eq.s32.totalorder %s37, 1
      %p118 = por %p116, %p117
      %p119 = scmp.ne.s32.totalorder %s110, %s111
      %p120 = scmp.eq.s32.totalorder %s37, 0
      %p121 = por %p119, %p120
      %p122 = scmp.ne.s32.totalorder %s110, %s111
      %p123 = scmp.eq.s32.totalorder %s38, 1
      %p124 = por %p122, %p123
      %p126 = scmp.ne.s32.totalorder %s111, %s125
      %p127 = scmp.eq.s32.totalorder %s38, 0
      %p128 = por %p126, %p127
      %s130 = sadd.s32 %s129, 1
      %p133 = scmp.eq.s32.totalorder %s32, 1
      %p134 = scmp.ne.s32.totalorder %s129, %s131
      %p135 = scmp.eq.s32.totalorder %s32, 0
      %p136 = por %p134, %p135
      %p137 = scmp.ne.s32.totalorder %s129, %s131
      %p138 = scmp.eq.s32.totalorder %s37, 1
      %p139 = por %p137, %p138
      %p140 = scmp.ne.s32.totalorder %s131, %s132
      %p141 = scmp.eq.s32.totalorder %s37, 0
      %p142 = por %p140, %p141
      %p143 = scmp.ne.s32.totalorder %s131, %s132
      %p144 = scmp.eq.s32.totalorder %s38, 1
      %p145 = por %p143, %p144
      %p147 = scmp.ne.s32.totalorder %s132, %s146
      %p148 = scmp.eq.s32.totalorder %s38, 0
      %p149 = por %p147, %p148
      %s151 = sadd.s32 %s150, 1
      %p154 = scmp.eq.s32.totalorder %s32, 1
      %p155 = scmp.ne.s32.totalorder %s150, %s152
      %p156 = scmp.eq.s32.totalorder %s32, 0
      %p157 = por %p155, %p156
      %p158 = scmp.ne.s32.totalorder %s150, %s152
      %p159 = scmp.eq.s32.totalorder %s37, 1
      %p160 = por %p158, %p159
      %p161 = scmp.ne.s32.totalorder %s152, %s153
      %p162 = scmp.eq.s32.totalorder %s37, 0
      %p163 = por %p161, %p162
      %p164 = scmp.ne.s32.totalorder %s152, %s153
      %p165 = scmp.eq.s32.totalorder %s38, 1
      %p166 = por %p164, %p165
      %p168 = scmp.ne.s32.totalorder %s153, %s167
      %p169 = scmp.eq.s32.totalorder %s38, 0
      %p170 = por %p168, %p169
      %s172 = sadd.s32 %s171, 1
      %p175 = scmp.eq.s32.totalorder %s32, 1
      %p176 = scmp.ne.s32.totalorder %s171, %s173
      %p177 = scmp.eq.s32.totalorder %s32, 0
      %p178 = por %p176, %p177
      %p179 = scmp.ne.s32.totalorder %s171, %s173
      %p180 = scmp.eq.s32.totalorder %s37, 1
      %p181 = por %p179, %p180
      %p182 = scmp.ne.s32.totalorder %s173, %s174
      %p183 = scmp.eq.s32.totalorder %s37, 0
      %p184 = por %p182, %p183
      %p185 = scmp.ne.s32.totalorder %s173, %s174
      %p186 = scmp.eq.s32.totalorder %s38, 1
      %p187 = por %p185, %p186
      %p189 = scmp.ne.s32.totalorder %s174, %s188
      %p190 = scmp.eq.s32.totalorder %s38, 0
      %p191 = por %p189, %p190
      %s193 = sadd.s32 %s192, 1
      %p196 = scmp.eq.s32.totalorder %s32, 1
      %p197 = scmp.ne.s32.totalorder %s192, %s194
      %p198 = scmp.eq.s32.totalorder %s32, 0
      %p199 = por %p197, %p198
      %p200 = scmp.ne.s32.totalorder %s192, %s194
      %p201 = scmp.eq.s32.totalorder %s37, 1
      %p202 = por %p200, %p201
      %p203 = scmp.ne.s32.totalorder %s194, %s195
      %p204 = scmp.eq.s32.totalorder %s37, 0
      %p205 = por %p203, %p204
      %p206 = scmp.ne.s32.totalorder %s194, %s195
      %p207 = scmp.eq.s32.totalorder %s38, 1
      %p208 = por %p206, %p207
      %p210 = scmp.ne.s32.totalorder %s195, %s209
      %p211 = scmp.eq.s32.totalorder %s38, 0
      %p212 = por %p210, %p211
      %s214 = sadd.s32 %s213, 1
      %p217 = scmp.eq.s32.totalorder %s32, 1
      %p218 = scmp.ne.s32.totalorder %s213, %s215
      %p219 = scmp.eq.s32.totalorder %s32, 0
      %p220 = por %p218, %p219
      %p221 = scmp.ne.s32.totalorder %s213, %s215
      %p222 = scmp.eq.s32.totalorder %s37, 1
      %p223 = por %p221, %p222
      %p224 = scmp.ne.s32.totalorder %s215, %s216
      %p225 = scmp.eq.s32.totalorder %s37, 0
      %p226 = por %p224, %p225
      %p227 = scmp.ne.s32.totalorder %s215, %s216
      %p228 = scmp.eq.s32.totalorder %s38, 1
      %p229 = por %p227, %p228
      %p231 = scmp.ne.s32.totalorder %s216, %s230
      %p232 = scmp.eq.s32.totalorder %s38, 0
      %p233 = por %p231, %p232
      %s235 = sadd.s32 %s234, 1
      %p238 = scmp.eq.s32.totalorder %s32, 1
      %p239 = scmp.ne.s32.totalorder %s234, %s236
      %p240 = scmp.eq.s32.totalorder %s32, 0
      %p241 = por %p239, %p240
      %p242 = scmp.ne.s32.totalorder %s234, %s236
      %p243 = scmp.eq.s32.totalorder %s37, 1
      %p244 = por %p242, %p243
      %p245 = scmp.ne.s32.totalorder %s236, %s237
      %p246 = scmp.eq.s32.totalorder %s37, 0
      %p247 = por %p245, %p246
      %p248 = scmp.ne.s32.totalorder %s236, %s237
      %p249 = scmp.eq.s32.totalorder %s38, 1
      %p250 = por %p248, %p249
      %p252 = scmp.ne.s32.totalorder %s237, %s251
      %p253 = scmp.eq.s32.totalorder %s38, 0
      %p254 = por %p252, %p253
      %s256 = sadd.s32 %s255, 1
      %p259 = scmp.eq.s32.totalorder %s32, 1
      %p260 = scmp.ne.s32.totalorder %s255, %s257
      %p261 = scmp.eq.s32.totalorder %s32, 0
      %p262 = por %p260, %p261
      %p263 = scmp.ne.s32.totalorder %s255, %s257
      %p264 = scmp.eq.s32.totalorder %s37, 1
      %p265 = por %p263, %p264
      %p266 = scmp.ne.s32.totalorder %s257, %s258
      %p267 = scmp.eq.s32.totalorder %s37, 0
      %p268 = por %p266, %p267
      %p269 = scmp.ne.s32.totalorder %s257, %s258
      %p270 = scmp.eq.s32.totalorder %s38, 1
      %p271 = por %p269, %p270
      %p273 = scmp.ne.s32.totalorder %s258, %s272
      %p274 = scmp.eq.s32.totalorder %s38, 0
      %p275 = por %p273, %p274
      %s277 = sadd.s32 %s276, 1
      %p280 = scmp.eq.s32.totalorder %s32, 1
      %p281 = scmp.ne.s32.totalorder %s276, %s278
      %p282 = scmp.eq.s32.totalorder %s32, 0
      %p283 = por %p281, %p282
      %p284 = scmp.ne.s32.totalorder %s276, %s278
      %p285 = scmp.eq.s32.totalorder %s37, 1
      %p286 = por %p284, %p285
      %p287 = scmp.ne.s32.totalorder %s278, %s279
      %p288 = scmp.eq.s32.totalorder %s37, 0
      %p289 = por %p287, %p288
      %p290 = scmp.ne.s32.totalorder %s278, %s279
      %p291 = scmp.eq.s32.totalorder %s38, 1
      %p292 = por %p290, %p291
      %p294 = scmp.ne.s32.totalorder %s279, %s293
      %p295 = scmp.eq.s32.totalorder %s38, 0
      %p296 = por %p294, %p295
      %s298 = sadd.s32 %s297, 1
      %p301 = scmp.eq.s32.totalorder %s32, 1
      %p302 = scmp.ne.s32.totalorder %s297, %s299
      %p303 = scmp.eq.s32.totalorder %s32, 0
      %p304 = por %p302, %p303
      %p305 = scmp.ne.s32.totalorder %s297, %s299
      %p306 = scmp.eq.s32.totalorder %s37, 1
      %p307 = por %p305, %p306
      %p308 = scmp.ne.s32.totalorder %s299, %s300
      %p309 = scmp.eq.s32.totalorder %s37, 0
      %p310 = por %p308, %p309
      %p311 = scmp.ne.s32.totalorder %s299, %s300
      %p312 = scmp.eq.s32.totalorder %s38, 1
      %p313 = por %p311, %p312
      %p315 = scmp.ne.s32.totalorder %s300, %s314
      %p316 = scmp.eq.s32.totalorder %s38, 0
      %p317 = por %p315, %p316
      %s318 = ssub.s32 %s32, %s39
      %p319 = scmp.eq.s32.totalorder %s318, 0
      %s321 = sadd.s32 %s320, 1
      %s322 = scalar_select %p319, %s320, %s321
      %p325 = pneg %p319
      %p326 = scmp.eq.s32.totalorder %s32, 1
      %p327 = por %p325, %p326
      %p328 = scmp.ne.s32.totalorder %s320, %s323
      %p329 = scmp.eq.s32.totalorder %s32, 0
      %p330 = por %p328, %p329
      %p331 = scmp.ne.s32.totalorder %s320, %s323
      %p332 = scmp.eq.s32.totalorder %s37, 1
      %p333 = por %p331, %p332
      %p334 = scmp.ne.s32.totalorder %s323, %s324
      %p335 = scmp.eq.s32.totalorder %s37, 0
      %p336 = por %p334, %p335
      %p337 = scmp.ne.s32.totalorder %s323, %s324
      %p338 = scmp.eq.s32.totalorder %s38, 1
      %p339 = por %p337, %p338
      %p341 = scmp.ne.s32.totalorder %s324, %s340
      %p342 = scmp.eq.s32.totalorder %s38, 0
      %p343 = por %p341, %p342
      %p344 = scmp.le.s32.totalorder 1, %s32
      %p345 = scmp.lt.s32.totalorder %s32, 3
      %p346 = pnand %p344, %p345
      %p347 = pneg %p346
      // Predicated region
      $region9: #{tpu_custom_call.1} parent=5 // pred_check
        _
      $region10: #{tpu_custom_call.1} parent=5 // pred_check_branch
        %349 = sbr.rel (%p346) target = $region12
      $region11: #{tpu_custom_call.1} parent=5 // pred_region
        %s350 = ssub.s32 %s32, 1
        // Predicated region
        $region13: #{tpu_custom_call.1} parent=11 // pred_check
          %p351 = pneg %p79
        $region14: #{tpu_custom_call.1} parent=11 // pred_check_branch
          %353 = sbr.rel (%p351) target = $region16
        $region15: #{tpu_custom_call.1} parent=11 // pred_region
          _
        $region16: #{tpu_custom_call.1} parent=11 // pred_fallthru
          _
        // Predicated region
        $region17: #{tpu_custom_call.1} parent=11 // pred_check
          %p354 = pneg %p100
        $region18: #{tpu_custom_call.1} parent=11 // pred_check_branch
          %356 = sbr.rel (%p354) target = $region20
        $region19: #{tpu_custom_call.1} parent=11 // pred_region
          _
        $region20: #{tpu_custom_call.1} parent=11 // pred_fallthru
          _
        // Predicated region
        $region21: #{tpu_custom_call.1} parent=11 // pred_check
          %p357 = pneg %p121
        $region22: #{tpu_custom_call.1} parent=11 // pred_check_branch
          %359 = sbr.rel (%p357) target = $region24
        $region23: #{tpu_custom_call.1} parent=11 // pred_region
          %s361 = ssub.s32 3072, 3072
          %362 = vsyncadd [#allocation8], %s361
          %s363 = sshll.u32 [#allocation7], 4
          %s364 = int_to_ptr.vmem [resolvable:$true] %s363
          %369 = dma.hbm_to_vmem [thread:$0]  %s4, 3072, %s364, [#allocation8], 192, 192, 12
        $region24: #{tpu_custom_call.1} parent=11 // pred_fallthru
          _
        // Predicated region
        $region25: #{tpu_custom_call.1} parent=11 // pred_check
          %p370 = pneg %p142
        $region26: #{tpu_custom_call.1} parent=11 // pred_check_branch
          %372 = sbr.rel (%p370) target = $region28
        $region27: #{tpu_custom_call.1} parent=11 // pred_region
          _
        $region28: #{tpu_custom_call.1} parent=11 // pred_fallthru
          _
        // Predicated region
        $region29: #{tpu_custom_call.1} parent=11 // pred_check
          %p373 = pneg %p163
        $region30: #{tpu_custom_call.1} parent=11 // pred_check_branch
          %375 = sbr.rel (%p373) target = $region32
        $region31: #{tpu_custom_call.1} parent=11 // pred_region
          %s377 = ssub.s32 1024, 1024
          %378 = vsyncadd [#allocation8], %s377
          %s379 = sshll.u32 [#allocation9], 4
          %s380 = int_to_ptr.vmem [resolvable:$true] %s379
          %385 = dma.hbm_to_vmem [thread:$0]  %s6, 1024, %s380, [#allocation8], 64, 64, 4
        $region32: #{tpu_custom_call.1} parent=11 // pred_fallthru
          _
        // Predicated region
        $region33: #{tpu_custom_call.1} parent=11 // pred_check
          %p386 = pneg %p184
        $region34: #{tpu_custom_call.1} parent=11 // pred_check_branch
          %388 = sbr.rel (%p386) target = $region36
        $region35: #{tpu_custom_call.1} parent=11 // pred_region
          _
        $region36: #{tpu_custom_call.1} parent=11 // pred_fallthru
          _
        // Predicated region
        $region37: #{tpu_custom_call.1} parent=11 // pred_check
          %p389 = pneg %p205
        $region38: #{tpu_custom_call.1} parent=11 // pred_check_branch
          %391 = sbr.rel (%p389) target = $region40
        $region39: #{tpu_custom_call.1} parent=11 // pred_region
          _
        $region40: #{tpu_custom_call.1} parent=11 // pred_fallthru
          _
        // Predicated region
        $region41: #{tpu_custom_call.1} parent=11 // pred_check
          %p392 = pneg %p226
        $region42: #{tpu_custom_call.1} parent=11 // pred_check_branch
          %394 = sbr.rel (%p392) target = $region44
        $region43: #{tpu_custom_call.1} parent=11 // pred_region
          _
        $region44: #{tpu_custom_call.1} parent=11 // pred_fallthru
          _
        // Predicated region
        $region45: #{tpu_custom_call.1} parent=11 // pred_check
          %p395 = pneg %p247
        $region46: #{tpu_custom_call.1} parent=11 // pred_check_branch
          %397 = sbr.rel (%p395) target = $region48
        $region47: #{tpu_custom_call.1} parent=11 // pred_region
          %s399 = ssub.s32 2048, 2048
          %400 = vsyncadd [#allocation11], %s399
          %s401 = sshll.u32 [#allocation10], 4
          %s402 = int_to_ptr.vmem [resolvable:$true] %s401
          %407 = dma.hbm_to_vmem [thread:$0]  %s10, 2048, %s402, [#allocation11], 128, 128, 8
        $region48: #{tpu_custom_call.1} parent=11 // pred_fallthru
          _
        // Predicated region
        $region49: #{tpu_custom_call.1} parent=11 // pred_check
          %p408 = pneg %p268
        $region50: #{tpu_custom_call.1} parent=11 // pred_check_branch
          %410 = sbr.rel (%p408) target = $region52
        $region51: #{tpu_custom_call.1} parent=11 // pred_region
          _
        $region52: #{tpu_custom_call.1} parent=11 // pred_fallthru
          _
        // Predicated region
        $region53: #{tpu_custom_call.1} parent=11 // pred_check
          %p411 = pneg %p289
        $region54: #{tpu_custom_call.1} parent=11 // pred_check_branch
          %413 = sbr.rel (%p411) target = $region56
        $region55: #{tpu_custom_call.1} parent=11 // pred_region
          %s415 = ssub.s32 2048, 2048
          %416 = vsyncadd [#allocation11], %s415
          %s417 = sshll.u32 [#allocation12], 4
          %s418 = int_to_ptr.vmem [resolvable:$true] %s417
          %423 = dma.hbm_to_vmem [thread:$0]  %s12, 2048, %s418, [#allocation11], 64, 64, 4
        $region56: #{tpu_custom_call.1} parent=11 // pred_fallthru
          _
        // Predicated region
        $region57: #{tpu_custom_call.1} parent=11 // pred_check
          %p424 = pneg %p310
        $region58: #{tpu_custom_call.1} parent=11 // pred_check_branch
          %426 = sbr.rel (%p424) target = $region60
        $region59: #{tpu_custom_call.1} parent=11 // pred_region
          _
        $region60: #{tpu_custom_call.1} parent=11 // pred_fallthru
          _
      $region12: #{tpu_custom_call.1} parent=5 // pred_fallthru
        _
      %p427 = scmp.lt.s32.totalorder %s32, 2
      // Predicated region
      $region61: #{tpu_custom_call.1} parent=5 // pred_check
        %p428 = pneg %p427
      $region62: #{tpu_custom_call.1} parent=5 // pred_check_branch
        %430 = sbr.rel (%p428) target = $region64
      $region63: #{tpu_custom_call.1} parent=5 // pred_region
        // Predicated region
        $region65: #{tpu_custom_call.1} parent=63 // pred_check
          %p431 = pneg %p52
        $region66: #{tpu_custom_call.1} parent=63 // pred_check_branch
          %433 = sbr.rel (%p431) target = $region68
        $region67: #{tpu_custom_call.1} parent=63 // pred_region
          %s434 = sand.u32 %s42, 1
          %s435 = scalar_lea.sflag [#allocation5], %s434
          %s436 = sand.u32 %s42, 1
          %s437 = smul.addr %s436, 8
          %s438 = scalar_lea.vmem [#allocation4], %s437
          %s440 = ssub.s32 128, 128
          %441 = vsyncadd %s435, %s440
          %s442 = smul.addr %s32, 128
          %s443 = scalar_lea.hbm %s1, %s442
          %s445 = sshll.u32 %s438, 4
          %s446 = int_to_ptr.vmem [resolvable:$true] %s445
          %448 = dma.hbm_to_vmem [thread:$0]  %s443, 128, %s446, %s435
        $region68: #{tpu_custom_call.1} parent=63 // pred_fallthru
          _
      $region64: #{tpu_custom_call.1} parent=5 // pred_fallthru
        _
      %p449 = scmp.le.s32.totalorder 1, %s32
      %p450 = scmp.lt.s32.totalorder %s32, 3
      %p451 = pnand %p449, %p450
      %p452 = pneg %p451
      // Predicated region
      $region69: #{tpu_custom_call.1} parent=5 // pred_check
        _
      $region70: #{tpu_custom_call.1} parent=5 // pred_check_branch
        %454 = sbr.rel (%p451) target = $region72
      $region71: #{tpu_custom_call.1} parent=5 // pred_region
        %s455 = ssub.s32 %s32, 1
        %s456 = sand.u32 %s45, 1
        %s457 = scalar_lea.sflag [#allocation5], %s456
        %s458 = sand.u32 %s45, 1
        %s459 = smul.addr %s458, 8
        %s460 = scalar_lea.vmem [#allocation4], %s459
        // Predicated region
        $region73: #{tpu_custom_call.1} parent=71 // pred_check
          %p461 = pneg %p58
        $region74: #{tpu_custom_call.1} parent=71 // pred_check_branch
          %463 = sbr.rel (%p461) target = $region76
        $region75: #{tpu_custom_call.1} parent=71 // pred_region
          %464 = dma.done %s457, 128
        $region76: #{tpu_custom_call.1} parent=71 // pred_fallthru
          _
        // Predicated region
        $region77: #{tpu_custom_call.1} parent=71 // pred_check
          %p465 = pneg %p121
        $region78: #{tpu_custom_call.1} parent=71 // pred_check_branch
          %467 = sbr.rel (%p465) target = $region80
        $region79: #{tpu_custom_call.1} parent=71 // pred_region
          %468 = dma.done [#allocation8], 3072
        $region80: #{tpu_custom_call.1} parent=71 // pred_fallthru
          _
        // Predicated region
        $region81: #{tpu_custom_call.1} parent=71 // pred_check
          %p469 = pneg %p163
        $region82: #{tpu_custom_call.1} parent=71 // pred_check_branch
          %471 = sbr.rel (%p469) target = $region84
        $region83: #{tpu_custom_call.1} parent=71 // pred_region
          %472 = dma.done [#allocation8], 1024
        $region84: #{tpu_custom_call.1} parent=71 // pred_fallthru
          _
        // Predicated region
        $region85: #{tpu_custom_call.1} parent=71 // pred_check
          %p473 = pneg %p247
        $region86: #{tpu_custom_call.1} parent=71 // pred_check_branch
          %475 = sbr.rel (%p473) target = $region88
        $region87: #{tpu_custom_call.1} parent=71 // pred_region
          %476 = dma.done [#allocation11], 2048
        $region88: #{tpu_custom_call.1} parent=71 // pred_fallthru
          _
        // Predicated region
        $region89: #{tpu_custom_call.1} parent=71 // pred_check
          %p477 = pneg %p289
        $region90: #{tpu_custom_call.1} parent=71 // pred_check_branch
          %479 = sbr.rel (%p477) target = $region92
        $region91: #{tpu_custom_call.1} parent=71 // pred_region
          %480 = dma.done [#allocation11], 2048
        $region92: #{tpu_custom_call.1} parent=71 // pred_fallthru
          _
        %s481 = sand.u32 %s45, 1
        %s482 = scalar_lea.sflag [#allocation5], %s481
        %s483 = sand.u32 %s45, 1
        %s484 = smul.addr %s483, 8
        %s485 = scalar_lea.vmem [#allocation4], %s484
        %p486 = pneg %p58
        %p487 = pneg %p55
        %p488 = pneg %p79
        %p489 = pneg %p76
        %p490 = pneg %p100
        %p491 = pneg %p97
        %p492 = pneg %p121
        %p493 = pneg %p118
        %p494 = pneg %p142
        %p495 = pneg %p139
        %p496 = pneg %p163
        %p497 = pneg %p160
        %p498 = pneg %p184
        %p499 = pneg %p181
        %p500 = pneg %p205
        %p501 = pneg %p202
        %p502 = pneg %p226
        %p503 = pneg %p223
        %p504 = pneg %p247
        %p505 = pneg %p244
        %p506 = pneg %p268
        %p507 = pneg %p265
        %p508 = pneg %p289
        %p509 = pneg %p286
        %p510 = pneg %p310
        %p511 = pneg %p307
        %p512 = pneg %p336
        %p513 = pneg %p333
        %s514 = sand.u32 %s323, 1
        %s515 = scalar_lea.sflag [#allocation6], %s514
        %s516 = sand.u32 %s323, 1
        %s517 = smul.addr %s516, 8
        %s518 = scalar_lea.vmem [#allocation13], %s517
        %v520 = vld [vmem:[%s460] sm:$0xff]
        %v521 = vlaneseq
        %v522 = vand.u32 %v521, 127
        %s523 = sld [smem:[#allocation3 + %s37]]
        %v524 = vstv %s523
        %vm525 = vcmp.ge.s32.totalorder %v522, %v524
        %v526 = vsel %vm525, -1e+18, 0.0
        %v527 = vld [vmem:[%s2] sm:$0x1]
        %v528 = vld [vmem:[%s3] sm:$0x1]
        %529 = vadd.xlane.f32.xlu0 %v520
        %v530 = vpop.xlane.xlu0 %529
        %v531 = vmul.f32 %v520, %v520
        %532 = vadd.xlane.f32.xlu0 %v531
        %v533 = vpop.xlane.xlu0 %532
        %v534 = vmul.f32 %v530, 0.0078125
        %v535 = vmul.f32 %v533, 0.0078125
        %v536 = vmul.f32 %v534, %v534
        %v537 = vsub.f32 %v535, %v536
        %v538 = vsub.f32 %v520, %v534
        %v539 = vadd.f32 %v537, 1e-06
        %v540 = vrsqrt.pop %v539
        %v541 = vmul.f32 %v538, %v540
        %v543 = vlaneseq
        %v544 = vshrl.u32 %v543, 7
        %v545 = vsub.s32 0, %v544
        %v546 = vrot.slane %v527, %v545
        %v548 = vmul.f32 %v541, %v546
        %v550 = vlaneseq
        %v551 = vshrl.u32 %v550, 7
        %v552 = vsub.s32 0, %v551
        %v553 = vrot.slane %v528, %v552
        %v555 = vadd.f32 %v548, %v553
        %v556 = vpack.c.bf16 %v555, %v555
        %v557 = vld [vmem:[#allocation7] sm:$0xff]
        %v558 = vld [vmem:[#allocation7 + $0x8] sm:$0xf]
        %v559 = vld [vmem:[#allocation7 + $0xc] sm:$0xff]
        %v560 = vld [vmem:[#allocation7 + $0x14] sm:$0xf]
        %v561 = vld [vmem:[#allocation7 + $0x18] sm:$0xff]
        %v562 = vld [vmem:[#allocation7 + $0x20] sm:$0xf]
        %v563 = vld [vmem:[#allocation7 + $0x24] sm:$0xff]
        %v564 = vld [vmem:[#allocation7 + $0x2c] sm:$0xf]
        %v565 = vld [vmem:[#allocation7 + $0x30] sm:$0xff]
        %v566 = vld [vmem:[#allocation7 + $0x38] sm:$0xf]
        %v567 = vld [vmem:[#allocation7 + $0x3c] sm:$0xff]
        %v568 = vld [vmem:[#allocation7 + $0x44] sm:$0xf]
        %v569 = vld [vmem:[#allocation7 + $0x48] sm:$0xff]
        %v570 = vld [vmem:[#allocation7 + $0x50] sm:$0xf]
        %v571 = vld [vmem:[#allocation7 + $0x54] sm:$0xff]
        %v572 = vld [vmem:[#allocation7 + $0x5c] sm:$0xf]
        %v573 = vld [vmem:[#allocation7 + $0x60] sm:$0xff]
        %v574 = vld [vmem:[#allocation7 + $0x68] sm:$0xf]
        %v575 = vld [vmem:[#allocation7 + $0x6c] sm:$0xff]
        %v576 = vld [vmem:[#allocation7 + $0x74] sm:$0xf]
        %v577 = vld [vmem:[#allocation7 + $0x78] sm:$0xff]
        %v578 = vld [vmem:[#allocation7 + $0x80] sm:$0xf]
        %v579 = vld [vmem:[#allocation7 + $0x84] sm:$0xff]
        %v580 = vld [vmem:[#allocation7 + $0x8c] sm:$0xf]
        %v581 = vld [vmem:[#allocation7 + $0x90] sm:$0xff]
        %v582 = vld [vmem:[#allocation7 + $0x98] sm:$0xf]
        %v583 = vld [vmem:[#allocation7 + $0x9c] sm:$0xff]
        %v584 = vld [vmem:[#allocation7 + $0xa4] sm:$0xf]
        %v585 = vld [vmem:[#allocation7 + $0xa8] sm:$0xff]
        %v586 = vld [vmem:[#allocation7 + $0xb0] sm:$0xf]
        %v587 = vld [vmem:[#allocation7 + $0xb4] sm:$0xff]
        %v588 = vld [vmem:[#allocation7 + $0xbc] sm:$0xf]
        %v589 = vld [vmem:[%s5] sm:$0x7]
        %v591 = vlaneseq
        %v592 = vshrl.u32 %v591, 7
        %v593 = vsub.s32 0, %v592
        %v594 = vrot.slane %v589, %v593
        %v595 = vlaneseq
        %v596 = vshrl.u32 %v595, 7
        %v597 = vsub.s32 1, %v596
        %v598 = vrot.slane %v589, %v597
        %v599 = vlaneseq
        %v600 = vshrl.u32 %v599, 7
        %v601 = vsub.s32 2, %v600
        %v602 = vrot.slane %v589, %v601
        %v638 = vunpack.c.l.b16 %v557
        %v639 = vunpack.c.h.b16 %v557
        %v640 = vunpack.c.l.b16 %v558
        %v641 = vunpack.c.l.b16 %v559
        %v642 = vunpack.c.h.b16 %v559
        %v643 = vunpack.c.l.b16 %v560
        %v644 = vunpack.c.l.b16 %v561
        %v645 = vunpack.c.h.b16 %v561
        %v646 = vunpack.c.l.b16 %v562
        %v647 = vunpack.c.l.b16 %v563
        %v648 = vunpack.c.h.b16 %v563
        %v649 = vunpack.c.l.b16 %v564
        %v650 = vunpack.c.l.b16 %v565
        %v651 = vunpack.c.h.b16 %v565
        %v652 = vunpack.c.l.b16 %v566
        %v653 = vunpack.c.l.b16 %v567
        %v654 = vunpack.c.h.b16 %v567
        %v655 = vunpack.c.l.b16 %v568
        %v656 = vunpack.c.l.b16 %v569
        %v657 = vunpack.c.h.b16 %v569
        %v658 = vunpack.c.l.b16 %v570
        %v659 = vunpack.c.l.b16 %v571
        %v660 = vunpack.c.h.b16 %v571
        %v661 = vunpack.c.l.b16 %v572
        %v662 = vunpack.c.l.b16 %v573
        %v663 = vunpack.c.h.b16 %v573
        %v664 = vunpack.c.l.b16 %v574
        %v665 = vunpack.c.l.b16 %v575
        %v666 = vunpack.c.h.b16 %v575
        %v667 = vunpack.c.l.b16 %v576
        %v668 = vunpack.c.l.b16 %v577
        %v669 = vunpack.c.h.b16 %v577
        %v670 = vunpack.c.l.b16 %v578
        %v671 = vunpack.c.l.b16 %v579
        %v672 = vunpack.c.h.b16 %v579
        %v673 = vunpack.c.l.b16 %v580
        %v674 = vunpack.c.l.b16 %v581
        %v675 = vunpack.c.h.b16 %v581
        %v676 = vunpack.c.l.b16 %v582
        %v677 = vunpack.c.l.b16 %v583
        %v678 = vunpack.c.h.b16 %v583
        %v679 = vunpack.c.l.b16 %v584
        %v680 = vunpack.c.l.b16 %v585
        %v681 = vunpack.c.h.b16 %v585
        %v682 = vunpack.c.l.b16 %v586
        %v683 = vunpack.c.l.b16 %v587
        %v684 = vunpack.c.h.b16 %v587
        %v685 = vunpack.c.l.b16 %v588
        %v686 = vpack.c.b16 %v641, %v638
        %v687 = vpack.c.b16 %v642, %v639
        %v688 = vpack.c.b16 %v643, %v640
        %v689 = vpack.c.b16 %v647, %v644
        %v690 = vpack.c.b16 %v648, %v645
        %v691 = vpack.c.b16 %v649, %v646
        %v692 = vpack.c.b16 %v653, %v650
        %v693 = vpack.c.b16 %v654, %v651
        %v694 = vpack.c.b16 %v655, %v652
        %v695 = vpack.c.b16 %v659, %v656
        %v696 = vpack.c.b16 %v660, %v657
        %v697 = vpack.c.b16 %v661, %v658
        %v698 = vpack.c.b16 %v665, %v662
        %v699 = vpack.c.b16 %v666, %v663
        %v700 = vpack.c.b16 %v667, %v664
        %v701 = vpack.c.b16 %v671, %v668
        %v702 = vpack.c.b16 %v672, %v669
        %v703 = vpack.c.b16 %v673, %v670
        %v704 = vpack.c.b16 %v677, %v674
        %v705 = vpack.c.b16 %v678, %v675
        %v706 = vpack.c.b16 %v679, %v676
        %v707 = vpack.c.b16 %v683, %v680
        %v708 = vpack.c.b16 %v684, %v681
        %v709 = vpack.c.b16 %v685, %v682
        %734 = vmatprep.subr.bf16.mxu0 %v687
        %735 = vmatpush1.bf16.msra.mxu0 %v686
        %736 = vmatprep.subr.bf16.mxu0 %v690
        %737 = vmatpush1.bf16.msra.mxu0 %v689
        %738 = vmatprep.subr.bf16.mxu0 %v693
        %739 = vmatpush1.bf16.msra.mxu0 %v692
        %740 = vmatprep.subr.bf16.mxu0 %v696
        %741 = vmatpush1.bf16.msra.mxu0 %v695
        %742 = vmatprep.subr.bf16.mxu0 %v699
        %743 = vmatpush1.bf16.msra.mxu0 %v698
        %744 = vmatprep.subr.bf16.mxu0 %v702
        %745 = vmatpush1.bf16.msra.mxu0 %v701
        %746 = vmatprep.subr.bf16.mxu0 %v705
        %747 = vmatpush1.bf16.msra.mxu0 %v704
        %748 = vmatprep.subr.bf16.mxu0 %v708
        %749 = vmatpush1.bf16.msra.mxu0 %v707
        %750 = vmatprep.subr.bf16.mxu0 0
        %751 = vmatpush1.bf16.msra.mxu0 0
        %752 = vmatprep.subr.bf16.mxu0 0
        %753 = vmatpush1.bf16.msra.mxu0 0
        %754 = vmatprep.subr.bf16.mxu0 0
        %755 = vmatpush1.bf16.msra.mxu0 0
        %756 = vmatprep.subr.bf16.mxu0 0
        %757 = vmatpush1.bf16.msra.mxu0 0
        %758 = vmatprep.subr.bf16.mxu0 0
        %759 = vmatpush1.bf16.msra.mxu0 0
        %760 = vmatprep.subr.bf16.mxu0 0
        %761 = vmatpush1.bf16.msra.mxu0 0
        %762 = vmatprep.subr.bf16.mxu0 0
        %763 = vmatpush1.bf16.msra.mxu0 0
        %764 = vmatprep.subr.bf16.mxu0 0
        %765 = vmatpush1.bf16.msra.mxu0 0
        %766 = vmatprep.mubr.bf16.mxu0 0
        %767 = vmatmul.mubr.bf16.gmra.mrb[0].mxu0 %v556
        %v768 = vpop.f32.mrb[0].mxu0
        %v769 = vadd.f32 %v594, %v768
        %v770 = vpop.f32.mrb[0].mxu0
        %v771 = vadd.f32 %v598, %v770
        %v772 = vpop.f32.mrb[0].mxu0
        %v773 = vpop.f32.mrb[0].mxu0
        %774 = vdwg.mxu0
        %775 = vmatprep.subr.bf16.mxu0 0
        %776 = vmatpush1.bf16.msra.mxu0 %v688
        %777 = vmatprep.subr.bf16.mxu0 0
        %778 = vmatpush1.bf16.msra.mxu0 %v691
        %779 = vmatprep.subr.bf16.mxu0 0
        %780 = vmatpush1.bf16.msra.mxu0 %v694
        %781 = vmatprep.subr.bf16.mxu0 0
        %782 = vmatpush1.bf16.msra.mxu0 %v697
        %783 = vmatprep.subr.bf16.mxu0 0
        %784 = vmatpush1.bf16.msra.mxu0 %v700
        %785 = vmatprep.subr.bf16.mxu0 0
        %786 = vmatpush1.bf16.msra.mxu0 %v703
        %787 = vmatprep.subr.bf16.mxu0 0
        %788 = vmatpush1.bf16.msra.mxu0 %v706
        %789 = vmatprep.subr.bf16.mxu0 0
        %790 = vmatpush1.bf16.msra.mxu0 %v709
        %791 = vmatprep.subr.bf16.mxu0 0
        %792 = vmatpush1.bf16.msra.mxu0 0
        %793 = vmatprep.subr.bf16.mxu0 0
        %794 = vmatpush1.bf16.msra.mxu0 0
        %795 = vmatprep.subr.bf16.mxu0 0
        %796 = vmatpush1.bf16.msra.mxu0 0
        %797 = vmatprep.subr.bf16.mxu0 0
        %798 = vmatpush1.bf16.msra.mxu0 0
        %799 = vmatprep.subr.bf16.mxu0 0
        %800 = vmatpush1.bf16.msra.mxu0 0
        %801 = vmatprep.subr.bf16.mxu0 0
        %802 = vmatpush1.bf16.msra.mxu0 0
        %803 = vmatprep.subr.bf16.mxu0 0
        %804 = vmatpush1.bf16.msra.mxu0 0
        %805 = vmatprep.subr.bf16.mxu0 0
        %806 = vmatpush1.bf16.msra.mxu0 0
        %807 = vmatprep.mubr.bf16.mxu0 0
        %808 = vmatmul.mubr.bf16.gmra.mrb[0].mxu0 %v556
        %v809 = vpop.f32.mrb[0].mxu0
        %v810 = vadd.f32 %v602, %v809
        %v811 = vpop.f32.mrb[0].mxu0
        %v812 = vpop.f32.mrb[0].mxu0
        %v813 = vpop.f32.mrb[0].mxu0
        %814 = vdwg.mxu0
        %v815 = vmul.f32 %v769, 0.17677669
        %v816 = vpack.c.bf16 %v815, %v815
        %v817 = vpack.c.bf16 %v771, %v771
        %v818 = vpack.c.bf16 %v810, %v810
        %vm819 = vcmask 261120
        %v821 = vsel %vm819, %v816, 0
        %v824 = vsel %vm819, %v817, 0
        %826 = vmatprep.subr.bf16.mxu0 0
        %827 = vmatpush1.bf16.xpose.msra.mxu0 %v824
        %828 = vmatprep.subr.bf16.mxu0 0
        %829 = vmatpush1.bf16.xpose.msra.mxu0 0
        %830 = vmatprep.subr.bf16.mxu0 0
        %831 = vmatpush1.bf16.xpose.msra.mxu0 0
        %832 = vmatprep.subr.bf16.mxu0 0
        %833 = vmatpush1.bf16.xpose.msra.mxu0 0
        %834 = vmatprep.subr.bf16.mxu0 0
        %835 = vmatpush1.bf16.xpose.msra.mxu0 0
        %836 = vmatprep.subr.bf16.mxu0 0
        %837 = vmatpush1.bf16.xpose.msra.mxu0 0
        %838 = vmatprep.subr.bf16.mxu0 0
        %839 = vmatpush1.bf16.xpose.msra.mxu0 0
        %840 = vmatprep.subr.bf16.mxu0 0
        %841 = vmatpush1.bf16.xpose.msra.mxu0 0
        %842 = vmatprep.subr.bf16.mxu0 0
        %843 = vmatpush1.bf16.xpose.msra.mxu0 0
        %844 = vmatprep.subr.bf16.mxu0 0
        %845 = vmatpush1.bf16.xpose.msra.mxu0 0
        %846 = vmatprep.subr.bf16.mxu0 0
        %847 = vmatpush1.bf16.xpose.msra.mxu0 0
        %848 = vmatprep.subr.bf16.mxu0 0
        %849 = vmatpush1.bf16.xpose.msra.mxu0 0
        %850 = vmatprep.subr.bf16.mxu0 0
        %851 = vmatpush1.bf16.xpose.msra.mxu0 0
        %852 = vmatprep.subr.bf16.mxu0 0
        %853 = vmatpush1.bf16.xpose.msra.mxu0 0
        %854 = vmatprep.subr.bf16.mxu0 0
        %855 = vmatpush1.bf16.xpose.msra.mxu0 0
        %856 = vmatprep.subr.bf16.mxu0 0
        %857 = vmatpush1.bf16.xpose.msra.mxu0 0
        %858 = vmatprep.mubr.bf16.mxu0 0
        %859 = vmatmul.mubr.bf16.gmra.mrb[0].mxu0 %v821
        %v860 = vpop.f32.mrb[0].mxu0
        %v861 = vadd.f32 %v526, %v860
        %v862 = vpop.f32.mrb[0].mxu0
        %v863 = vpop.f32.mrb[0].mxu0
        %v864 = vpop.f32.mrb[0].mxu0
        %865 = vdwg.mxu0
        %vm866 = vcmask 64512
        %v867 = vsel %vm866, %v861, -inf
        %868 = vmax.xlane.f32.xlu0 %v867
        %v869 = vpop.xlane.xlu0 %868
        %v870 = vsub.f32 %v861, %v869
        %v871 = vmul.f32 %v870, 1.442695
        %v872 = vpow.pop %v871
        %v873 = vsel %vm866, %v872, 0.0
        %874 = vadd.xlane.f32.xlu0 %v873
        %v875 = vpop.xlane.xlu0 %874
        %v876 = vrcp.pop %v875
        %v877 = vmul.f32 %v872, %v876
        %v878 = vpack.c.bf16 %v877, %v877
        %v880 = vsel %vm866, %v878, 0
        %vm882 = vcmask 1043456
        %v884 = vsel %vm882, %v818, 0
        %886 = vmatprep.subr.bf16.mxu0 0
        %887 = vmatpush1.bf16.msra.mxu0 %v884
        %888 = vmatprep.subr.bf16.mxu0 0
        %889 = vmatpush1.bf16.msra.mxu0 0
        %890 = vmatprep.subr.bf16.mxu0 0
        %891 = vmatpush1.bf16.msra.mxu0 0
        %892 = vmatprep.subr.bf16.mxu0 0
        %893 = vmatpush1.bf16.msra.mxu0 0
        %894 = vmatprep.subr.bf16.mxu0 0
        %895 = vmatpush1.bf16.msra.mxu0 0
        %896 = vmatprep.subr.bf16.mxu0 0
        %897 = vmatpush1.bf16.msra.mxu0 0
        %898 = vmatprep.subr.bf16.mxu0 0
        %899 = vmatpush1.bf16.msra.mxu0 0
        %900 = vmatprep.subr.bf16.mxu0 0
        %901 = vmatpush1.bf16.msra.mxu0 0
        %902 = vmatprep.subr.bf16.mxu0 0
        %903 = vmatpush1.bf16.msra.mxu0 0
        %904 = vmatprep.subr.bf16.mxu0 0
        %905 = vmatpush1.bf16.msra.mxu0 0
        %906 = vmatprep.subr.bf16.mxu0 0
        %907 = vmatpush1.bf16.msra.mxu0 0
        %908 = vmatprep.subr.bf16.mxu0 0
        %909 = vmatpush1.bf16.msra.mxu0 0
        %910 = vmatprep.subr.bf16.mxu0 0
        %911 = vmatpush1.bf16.msra.mxu0 0
        %912 = vmatprep.subr.bf16.mxu0 0
        %913 = vmatpush1.bf16.msra.mxu0 0
        %914 = vmatprep.subr.bf16.mxu0 0
        %915 = vmatpush1.bf16.msra.mxu0 0
        %916 = vmatprep.subr.bf16.mxu0 0
        %917 = vmatpush1.bf16.msra.mxu0 0
        %918 = vmatprep.mubr.bf16.mxu0 0
        %919 = vmatmul.mubr.bf16.gmra.mrb[0].mxu0 %v880
        %v920 = vpop.f32.mrb[0].mxu0
        %v921 = vadd.f32 0.0, %v920
        %v922 = vpop.f32.mrb[0].mxu0
        %v923 = vpop.f32.mrb[0].mxu0
        %v924 = vpop.f32.mrb[0].mxu0
        %925 = vdwg.mxu0
        %927 = vrot.lane.b32.xlu0 %v816, 96
        %v928 = vpop.permute.xlu0 %927
        %930 = vrot.lane.b32.xlu0 %v817, 96
        %v931 = vpop.permute.xlu0 %930
        %v933 = vsel %vm819, %v928, 0
        %v936 = vsel %vm819, %v931, 0
        %938 = vmatprep.subr.bf16.mxu0 0
        %939 = vmatpush1.bf16.xpose.msra.mxu0 %v936
        %940 = vmatprep.subr.bf16.mxu0 0
        %941 = vmatpush1.bf16.xpose.msra.mxu0 0
        %942 = vmatprep.subr.bf16.mxu0 0
        %943 = vmatpush1.bf16.xpose.msra.mxu0 0
        %944 = vmatprep.subr.bf16.mxu0 0
        %945 = vmatpush1.bf16.xpose.msra.mxu0 0
        %946 = vmatprep.subr.bf16.mxu0 0
        %947 = vmatpush1.bf16.xpose.msra.mxu0 0
        %948 = vmatprep.subr.bf16.mxu0 0
        %949 = vmatpush1.bf16.xpose.msra.mxu0 0
        %950 = vmatprep.subr.bf16.mxu0 0
        %951 = vmatpush1.bf16.xpose.msra.mxu0 0
        %952 = vmatprep.subr.bf16.mxu0 0
        %953 = vmatpush1.bf16.xpose.msra.mxu0 0
        %954 = vmatprep.subr.bf16.mxu0 0
        %955 = vmatpush1.bf16.xpose.msra.mxu0 0
        %956 = vmatprep.subr.bf16.mxu0 0
        %957 = vmatpush1.bf16.xpose.msra.mxu0 0
        %958 = vmatprep.subr.bf16.mxu0 0
        %959 = vmatpush1.bf16.xpose.msra.mxu0 0
        %960 = vmatprep.subr.bf16.mxu0 0
        %961 = vmatpush1.bf16.xpose.msra.mxu0 0
        %962 = vmatprep.subr.bf16.mxu0 0
        %963 = vmatpush1.bf16.xpose.msra.mxu0 0
        %964 = vmatprep.subr.bf16.mxu0 0
        %965 = vmatpush1.bf16.xpose.msra.mxu0 0
        %966 = vmatprep.subr.bf16.mxu0 0
        %967 = vmatpush1.bf16.xpose.msra.mxu0 0
        %968 = vmatprep.subr.bf16.mxu0 0
        %969 = vmatpush1.bf16.xpose.msra.mxu0 0
        %970 = vmatprep.mubr.bf16.mxu0 0
        %971 = vmatmul.mubr.bf16.gmra.mrb[0].mxu0 %v933
        %v972 = vpop.f32.mrb[0].mxu0
        %v973 = vadd.f32 %v526, %v972
        %v974 = vpop.f32.mrb[0].mxu0
        %v975 = vpop.f32.mrb[0].mxu0
        %v976 = vpop.f32.mrb[0].mxu0
        %977 = vdwg.mxu0
        %v978 = vsel %vm866, %v973, -inf
        %979 = vmax.xlane.f32.xlu0 %v978
        %v980 = vpop.xlane.xlu0 %979
        %v981 = vsub.f32 %v973, %v980
        %v982 = vmul.f32 %v981, 1.442695
        %v983 = vpow.pop %v982
        %v984 = vsel %vm866, %v983, 0.0
        %985 = vadd.xlane.f32.xlu0 %v984
        %v986 = vpop.xlane.xlu0 %985
        %v987 = vrcp.pop %v986
        %v988 = vmul.f32 %v983, %v987
        %v989 = vpack.c.bf16 %v988, %v988
        %991 = vrot.lane.b32.xlu0 %v818, 96
        %v992 = vpop.permute.xlu0 %991
        %v994 = vsel %vm866, %v989, 0
        %v997 = vsel %vm882, %v992, 0
        %999 = vmatprep.subr.bf16.mxu0 0
        %1000 = vmatpush1.bf16.msra.mxu0 %v997
        %1001 = vmatprep.subr.bf16.mxu0 0
        %1002 = vmatpush1.bf16.msra.mxu0 0
        %1003 = vmatprep.subr.bf16.mxu0 0
        %1004 = vmatpush1.bf16.msra.mxu0 0
        %1005 = vmatprep.subr.bf16.mxu0 0
        %1006 = vmatpush1.bf16.msra.mxu0 0
        %1007 = vmatprep.subr.bf16.mxu0 0
        %1008 = vmatpush1.bf16.msra.mxu0 0
        %1009 = vmatprep.subr.bf16.mxu0 0
        %1010 = vmatpush1.bf16.msra.mxu0 0
        %1011 = vmatprep.subr.bf16.mxu0 0
        %1012 = vmatpush1.bf16.msra.mxu0 0
        %1013 = vmatprep.subr.bf16.mxu0 0
        %1014 = vmatpush1.bf16.msra.mxu0 0
        %1015 = vmatprep.subr.bf16.mxu0 0
        %1016 = vmatpush1.bf16.msra.mxu0 0
        %1017 = vmatprep.subr.bf16.mxu0 0
        %1018 = vmatpush1.bf16.msra.mxu0 0
        %1019 = vmatprep.subr.bf16.mxu0 0
        %1020 = vmatpush1.bf16.msra.mxu0 0
        %1021 = vmatprep.subr.bf16.mxu0 0
        %1022 = vmatpush1.bf16.msra.mxu0 0
        %1023 = vmatprep.subr.bf16.mxu0 0
        %1024 = vmatpush1.bf16.msra.mxu0 0
        %1025 = vmatprep.subr.bf16.mxu0 0
        %1026 = vmatpush1.bf16.msra.mxu0 0
        %1027 = vmatprep.subr.bf16.mxu0 0
        %1028 = vmatpush1.bf16.msra.mxu0 0
        %1029 = vmatprep.subr.bf16.mxu0 0
        %1030 = vmatpush1.bf16.msra.mxu0 0
        %1031 = vmatprep.mubr.bf16.mxu0 0
        %1032 = vmatmul.mubr.bf16.gmra.mrb[0].mxu0 %v994
        %v1033 = vpop.f32.mrb[0].mxu0
        %v1034 = vadd.f32 0.0, %v1033
        %v1035 = vpop.f32.mrb[0].mxu0
        %v1036 = vpop.f32.mrb[0].mxu0
        %v1037 = vpop.f32.mrb[0].mxu0
        %1038 = vdwg.mxu0
        %1039 = vrot.lane.b32.xlu0 %v816, 64
        %v1040 = vpop.permute.xlu0 %1039
        %1041 = vrot.lane.b32.xlu0 %v817, 64
        %v1042 = vpop.permute.xlu0 %1041
        %v1044 = vsel %vm819, %v1040, 0
        %v1047 = vsel %vm819, %v1042, 0
        %1049 = vmatprep.subr.bf16.mxu0 0
        %1050 = vmatpush1.bf16.xpose.msra.mxu0 %v1047
        %1051 = vmatprep.subr.bf16.mxu0 0
        %1052 = vmatpush1.bf16.xpose.msra.mxu0 0
        %1053 = vmatprep.subr.bf16.mxu0 0
        %1054 = vmatpush1.bf16.xpose.msra.mxu0 0
        %1055 = vmatprep.subr.bf16.mxu0 0
        %1056 = vmatpush1.bf16.xpose.msra.mxu0 0
        %1057 = vmatprep.subr.bf16.mxu0 0
        %1058 = vmatpush1.bf16.xpose.msra.mxu0 0
        %1059 = vmatprep.subr.bf16.mxu0 0
        %1060 = vmatpush1.bf16.xpose.msra.mxu0 0
        %1061 = vmatprep.subr.bf16.mxu0 0
        %1062 = vmatpush1.bf16.xpose.msra.mxu0 0
        %1063 = vmatprep.subr.bf16.mxu0 0
        %1064 = vmatpush1.bf16.xpose.msra.mxu0 0
        %1065 = vmatprep.subr.bf16.mxu0 0
        %1066 = vmatpush1.bf16.xpose.msra.mxu0 0
        %1067 = vmatprep.subr.bf16.mxu0 0
        %1068 = vmatpush1.bf16.xpose.msra.mxu0 0
        %1069 = vmatprep.subr.bf16.mxu0 0
        %1070 = vmatpush1.bf16.xpose.msra.mxu0 0
        %1071 = vmatprep.subr.bf16.mxu0 0
        %1072 = vmatpush1.bf16.xpose.msra.mxu0 0
        %1073 = vmatprep.subr.bf16.mxu0 0
        %1074 = vmatpush1.bf16.xpose.msra.mxu0 0
        %1075 = vmatprep.subr.bf16.mxu0 0
        %1076 = vmatpush1.bf16.xpose.msra.mxu0 0
        %1077 = vmatprep.subr.bf16.mxu0 0
        %1078 = vmatpush1.bf16.xpose.msra.mxu0 0
        %1079 = vmatprep.subr.bf16.mxu0 0
        %1080 = vmatpush1.bf16.xpose.msra.mxu0 0
        %1081 = vmatprep.mubr.bf16.mxu0 0
        %1082 = vmatmul.mubr.bf16.gmra.mrb[0].mxu0 %v1044
        %v1083 = vpop.f32.mrb[0].mxu0
        %v1084 = vadd.f32 %v526, %v1083
        %v1085 = vpop.f32.mrb[0].mxu0
        %v1086 = vpop.f32.mrb[0].mxu0
        %v1087 = vpop.f32.mrb[0].mxu0
        %1088 = vdwg.mxu0
        %v1089 = vsel %vm866, %v1084, -inf
        %1090 = vmax.xlane.f32.xlu0 %v1089
        %v1091 = vpop.xlane.xlu0 %1090
        %v1092 = vsub.f32 %v1084, %v1091
        %v1093 = vmul.f32 %v1092, 1.442695
        %v1094 = vpow.pop %v1093
        %v1095 = vsel %vm866, %v1094, 0.0
        %1096 = vadd.xlane.f32.xlu0 %v1095
        %v1097 = vpop.xlane.xlu0 %1096
        %v1098 = vrcp.pop %v1097
        %v1099 = vmul.f32 %v1094, %v1098
        %v1100 = vpack.c.bf16 %v1099, %v1099
        %1101 = vrot.lane.b32.xlu0 %v818, 64
        %v1102 = vpop.permute.xlu0 %1101
        %v1104 = vsel %vm866, %v1100, 0
        %v1107 = vsel %vm882, %v1102, 0
        %1109 = vmatprep.subr.bf16.mxu0 0
        %1110 = vmatpush1.bf16.msra.mxu0 %v1107
        %1111 = vmatprep.subr.bf16.mxu0 0
        %1112 = vmatpush1.bf16.msra.mxu0 0
        %1113 = vmatprep.subr.bf16.mxu0 0
        %1114 = vmatpush1.bf16.msra.mxu0 0
        %1115 = vmatprep.subr.bf16.mxu0 0
        %1116 = vmatpush1.bf16.msra.mxu0 0
        %1117 = vmatprep.subr.bf16.mxu0 0
        %1118 = vmatpush1.bf16.msra.mxu0 0
        %1119 = vmatprep.subr.bf16.mxu0 0
        %1120 = vmatpush1.bf16.msra.mxu0 0
        %1121 = vmatprep.subr.bf16.mxu0 0
        %1122 = vmatpush1.bf16.msra.mxu0 0
        %1123 = vmatprep.subr.bf16.mxu0 0
        %1124 = vmatpush1.bf16.msra.mxu0 0
        %1125 = vmatprep.subr.bf16.mxu0 0
        %1126 = vmatpush1.bf16.msra.mxu0 0
        %1127 = vmatprep.subr.bf16.mxu0 0
        %1128 = vmatpush1.bf16.msra.mxu0 0
        %1129 = vmatprep.subr.bf16.mxu0 0
        %1130 = vmatpush1.bf16.msra.mxu0 0
        %1131 = vmatprep.subr.bf16.mxu0 0
        %1132 = vmatpush1.bf16.msra.mxu0 0
        %1133 = vmatprep.subr.bf16.mxu0 0
        %1134 = vmatpush1.bf16.msra.mxu0 0
        %1135 = vmatprep.subr.bf16.mxu0 0
        %1136 = vmatpush1.bf16.msra.mxu0 0
        %1137 = vmatprep.subr.bf16.mxu0 0
        %1138 = vmatpush1.bf16.msra.mxu0 0
        %1139 = vmatprep.subr.bf16.mxu0 0
        %1140 = vmatpush1.bf16.msra.mxu0 0
        %1141 = vmatprep.mubr.bf16.mxu0 0
        %1142 = vmatmul.mubr.bf16.gmra.mrb[0].mxu0 %v1104
        %v1143 = vpop.f32.mrb[0].mxu0
        %v1144 = vadd.f32 0.0, %v1143
        %v1145 = vpop.f32.mrb[0].mxu0
        %v1146 = vpop.f32.mrb[0].mxu0
        %v1147 = vpop.f32.mrb[0].mxu0
        %1148 = vdwg.mxu0
        %1149 = vrot.lane.b32.xlu0 %v816, 32
        %v1150 = vpop.permute.xlu0 %1149
        %1151 = vrot.lane.b32.xlu0 %v817, 32
        %v1152 = vpop.permute.xlu0 %1151
        %v1154 = vsel %vm819, %v1150, 0
        %v1157 = vsel %vm819, %v1152, 0
        %1159 = vmatprep.subr.bf16.mxu0 0
        %1160 = vmatpush1.bf16.xpose.msra.mxu0 %v1157
        %1161 = vmatprep.subr.bf16.mxu0 0
        %1162 = vmatpush1.bf16.xpose.msra.mxu0 0
        %1163 = vmatprep.subr.bf16.mxu0 0
        %1164 = vmatpush1.bf16.xpose.msra.mxu0 0
        %1165 = vmatprep.subr.bf16.mxu0 0
        %1166 = vmatpush1.bf16.xpose.msra.mxu0 0
        %1167 = vmatprep.subr.bf16.mxu0 0
        %1168 = vmatpush1.bf16.xpose.msra.mxu0 0
        %1169 = vmatprep.subr.bf16.mxu0 0
        %1170 = vmatpush1.bf16.xpose.msra.mxu0 0
        %1171 = vmatprep.subr.bf16.mxu0 0
        %1172 = vmatpush1.bf16.xpose.msra.mxu0 0
        %1173 = vmatprep.subr.bf16.mxu0 0
        %1174 = vmatpush1.bf16.xpose.msra.mxu0 0
        %1175 = vmatprep.subr.bf16.mxu0 0
        %1176 = vmatpush1.bf16.xpose.msra.mxu0 0
        %1177 = vmatprep.subr.bf16.mxu0 0
        %1178 = vmatpush1.bf16.xpose.msra.mxu0 0
        %1179 = vmatprep.subr.bf16.mxu0 0
        %1180 = vmatpush1.bf16.xpose.msra.mxu0 0
        %1181 = vmatprep.subr.bf16.mxu0 0
        %1182 = vmatpush1.bf16.xpose.msra.mxu0 0
        %1183 = vmatprep.subr.bf16.mxu0 0
        %1184 = vmatpush1.bf16.xpose.msra.mxu0 0
        %1185 = vmatprep.subr.bf16.mxu0 0
        %1186 = vmatpush1.bf16.xpose.msra.mxu0 0
        %1187 = vmatprep.subr.bf16.mxu0 0
        %1188 = vmatpush1.bf16.xpose.msra.mxu0 0
        %1189 = vmatprep.subr.bf16.mxu0 0
        %1190 = vmatpush1.bf16.xpose.msra.mxu0 0
        %1191 = vmatprep.mubr.bf16.mxu0 0
        %1192 = vmatmul.mubr.bf16.gmra.mrb[0].mxu0 %v1154
        %v1193 = vpop.f32.mrb[0].mxu0
        %v1194 = vadd.f32 %v526, %v1193
        %v1195 = vpop.f32.mrb[0].mxu0
        %v1196 = vpop.f32.mrb[0].mxu0
        %v1197 = vpop.f32.mrb[0].mxu0
        %1198 = vdwg.mxu0
        %v1199 = vsel %vm866, %v1194, -inf
        %1200 = vmax.xlane.f32.xlu0 %v1199
        %v1201 = vpop.xlane.xlu0 %1200
        %v1202 = vsub.f32 %v1194, %v1201
        %v1203 = vmul.f32 %v1202, 1.442695
        %v1204 = vpow.pop %v1203
        %v1205 = vsel %vm866, %v1204, 0.0
        %1206 = vadd.xlane.f32.xlu0 %v1205
        %v1207 = vpop.xlane.xlu0 %1206
        %v1208 = vrcp.pop %v1207
        %v1209 = vmul.f32 %v1204, %v1208
        %v1210 = vpack.c.bf16 %v1209, %v1209
        %1211 = vrot.lane.b32.xlu0 %v818, 32
        %v1212 = vpop.permute.xlu0 %1211
        %v1214 = vsel %vm866, %v1210, 0
        %v1217 = vsel %vm882, %v1212, 0
        %1219 = vmatprep.subr.bf16.mxu0 0
        %1220 = vmatpush1.bf16.msra.mxu0 %v1217
        %1221 = vmatprep.subr.bf16.mxu0 0
        %1222 = vmatpush1.bf16.msra.mxu0 0
        %1223 = vmatprep.subr.bf16.mxu0 0
        %1224 = vmatpush1.bf16.msra.mxu0 0
        %1225 = vmatprep.subr.bf16.mxu0 0
        %1226 = vmatpush1.bf16.msra.mxu0 0
        %1227 = vmatprep.subr.bf16.mxu0 0
        %1228 = vmatpush1.bf16.msra.mxu0 0
        %1229 = vmatprep.subr.bf16.mxu0 0
        %1230 = vmatpush1.bf16.msra.mxu0 0
        %1231 = vmatprep.subr.bf16.mxu0 0
        %1232 = vmatpush1.bf16.msra.mxu0 0
        %1233 = vmatprep.subr.bf16.mxu0 0
        %1234 = vmatpush1.bf16.msra.mxu0 0
        %1235 = vmatprep.subr.bf16.mxu0 0
        %1236 = vmatpush1.bf16.msra.mxu0 0
        %1237 = vmatprep.subr.bf16.mxu0 0
        %1238 = vmatpush1.bf16.msra.mxu0 0
        %1239 = vmatprep.subr.bf16.mxu0 0
        %1240 = vmatpush1.bf16.msra.mxu0 0
        %1241 = vmatprep.subr.bf16.mxu0 0
        %1242 = vmatpush1.bf16.msra.mxu0 0
        %1243 = vmatprep.subr.bf16.mxu0 0
        %1244 = vmatpush1.bf16.msra.mxu0 0
        %1245 = vmatprep.subr.bf16.mxu0 0
        %1246 = vmatpush1.bf16.msra.mxu0 0
        %1247 = vmatprep.subr.bf16.mxu0 0
        %1248 = vmatpush1.bf16.msra.mxu0 0
        %1249 = vmatprep.subr.bf16.mxu0 0
        %1250 = vmatpush1.bf16.msra.mxu0 0
        %1251 = vmatprep.mubr.bf16.mxu0 0
        %1252 = vmatmul.mubr.bf16.gmra.mrb[0].mxu0 %v1214
        %v1253 = vpop.f32.mrb[0].mxu0
        %v1254 = vadd.f32 0.0, %v1253
        %v1255 = vpop.f32.mrb[0].mxu0
        %v1256 = vpop.f32.mrb[0].mxu0
        %v1257 = vpop.f32.mrb[0].mxu0
        %1258 = vdwg.mxu0
        %1260 = vrot.lane.b32.xlu0 %v1034, 32
        %v1261 = vpop.permute.xlu0 %1260
        %1264 = vrot.lane.b32.xlu0 %v1144, 64
        %v1265 = vpop.permute.xlu0 %1264
        %1268 = vrot.lane.b32.xlu0 %v1254, 96
        %v1269 = vpop.permute.xlu0 %1268
        %v1271 = vsel %vm819, %v921, %v1261
        %vm1272 = vcmask 523264
        %v1273 = vsel %vm1272, %v1271, %v1265
        %vm1274 = vcmask 785408
        %v1275 = vsel %vm1274, %v1273, %v1269
        %v1276 = vpack.c.bf16 %v1275, %v1275
        %v1277 = vld [vmem:[#allocation9] sm:$0xf]
        %v1278 = vld [vmem:[#allocation9 + $0x4] sm:$0xf]
        %v1279 = vld [vmem:[#allocation9 + $0x8] sm:$0xf]
        %v1280 = vld [vmem:[#allocation9 + $0xc] sm:$0xf]
        %v1281 = vld [vmem:[#allocation9 + $0x10] sm:$0xf]
        %v1282 = vld [vmem:[#allocation9 + $0x14] sm:$0xf]
        %v1283 = vld [vmem:[#allocation9 + $0x18] sm:$0xf]
        %v1284 = vld [vmem:[#allocation9 + $0x1c] sm:$0xf]
        %v1285 = vld [vmem:[#allocation9 + $0x20] sm:$0xf]
        %v1286 = vld [vmem:[#allocation9 + $0x24] sm:$0xf]
        %v1287 = vld [vmem:[#allocation9 + $0x28] sm:$0xf]
        %v1288 = vld [vmem:[#allocation9 + $0x2c] sm:$0xf]
        %v1289 = vld [vmem:[#allocation9 + $0x30] sm:$0xf]
        %v1290 = vld [vmem:[#allocation9 + $0x34] sm:$0xf]
        %v1291 = vld [vmem:[#allocation9 + $0x38] sm:$0xf]
        %v1292 = vld [vmem:[#allocation9 + $0x3c] sm:$0xf]
        %v1293 = vld [vmem:[%s7] sm:$0x1]
        %v1295 = vlaneseq
        %v1296 = vshrl.u32 %v1295, 7
        %v1297 = vsub.s32 0, %v1296
        %v1298 = vrot.slane %v1293, %v1297
        %v1316 = vunpack.c.l.b16 %v1277
        %v1317 = vunpack.c.l.b16 %v1278
        %v1318 = vunpack.c.l.b16 %v1279
        %v1319 = vunpack.c.l.b16 %v1280
        %v1320 = vunpack.c.l.b16 %v1281
        %v1321 = vunpack.c.l.b16 %v1282
        %v1322 = vunpack.c.l.b16 %v1283
        %v1323 = vunpack.c.l.b16 %v1284
        %v1324 = vunpack.c.l.b16 %v1285
        %v1325 = vunpack.c.l.b16 %v1286
        %v1326 = vunpack.c.l.b16 %v1287
        %v1327 = vunpack.c.l.b16 %v1288
        %v1328 = vunpack.c.l.b16 %v1289
        %v1329 = vunpack.c.l.b16 %v1290
        %v1330 = vunpack.c.l.b16 %v1291
        %v1331 = vunpack.c.l.b16 %v1292
        %v1332 = vpack.c.b16 %v1317, %v1316
        %v1333 = vpack.c.b16 %v1319, %v1318
        %v1334 = vpack.c.b16 %v1321, %v1320
        %v1335 = vpack.c.b16 %v1323, %v1322
        %v1336 = vpack.c.b16 %v1325, %v1324
        %v1337 = vpack.c.b16 %v1327, %v1326
        %v1338 = vpack.c.b16 %v1329, %v1328
        %v1339 = vpack.c.b16 %v1331, %v1330
        %1348 = vmatprep.subr.bf16.mxu0 0
        %1349 = vmatpush1.bf16.msra.mxu0 %v1332
        %1350 = vmatprep.subr.bf16.mxu0 0
        %1351 = vmatpush1.bf16.msra.mxu0 %v1333
        %1352 = vmatprep.subr.bf16.mxu0 0
        %1353 = vmatpush1.bf16.msra.mxu0 %v1334
        %1354 = vmatprep.subr.bf16.mxu0 0
        %1355 = vmatpush1.bf16.msra.mxu0 %v1335
        %1356 = vmatprep.subr.bf16.mxu0 0
        %1357 = vmatpush1.bf16.msra.mxu0 %v1336
        %1358 = vmatprep.subr.bf16.mxu0 0
        %1359 = vmatpush1.bf16.msra.mxu0 %v1337
        %1360 = vmatprep.subr.bf16.mxu0 0
        %1361 = vmatpush1.bf16.msra.mxu0 %v1338
        %1362 = vmatprep.subr.bf16.mxu0 0
        %1363 = vmatpush1.bf16.msra.mxu0 %v1339
        %1364 = vmatprep.subr.bf16.mxu0 0
        %1365 = vmatpush1.bf16.msra.mxu0 0
        %1366 = vmatprep.subr.bf16.mxu0 0
        %1367 = vmatpush1.bf16.msra.mxu0 0
        %1368 = vmatprep.subr.bf16.mxu0 0
        %1369 = vmatpush1.bf16.msra.mxu0 0
        %1370 = vmatprep.subr.bf16.mxu0 0
        %1371 = vmatpush1.bf16.msra.mxu0 0
        %1372 = vmatprep.subr.bf16.mxu0 0
        %1373 = vmatpush1.bf16.msra.mxu0 0
        %1374 = vmatprep.subr.bf16.mxu0 0
        %1375 = vmatpush1.bf16.msra.mxu0 0
        %1376 = vmatprep.subr.bf16.mxu0 0
        %1377 = vmatpush1.bf16.msra.mxu0 0
        %1378 = vmatprep.subr.bf16.mxu0 0
        %1379 = vmatpush1.bf16.msra.mxu0 0
        %1380 = vmatprep.mubr.bf16.mxu0 0
        %1381 = vmatmul.mubr.bf16.gmra.mrb[0].mxu0 %v1276
        %v1382 = vpop.f32.mrb[0].mxu0
        %v1383 = vadd.f32 %v1298, %v1382
        %v1384 = vpop.f32.mrb[0].mxu0
        %v1385 = vpop.f32.mrb[0].mxu0
        %v1386 = vpop.f32.mrb[0].mxu0
        %1387 = vdwg.mxu0
        %v1388 = vadd.f32 %v1383, %v520
        %v1389 = vld [vmem:[%s8] sm:$0x1]
        %v1390 = vld [vmem:[%s9] sm:$0x1]
        %1391 = vadd.xlane.f32.xlu0 %v1388
        %v1392 = vpop.xlane.xlu0 %1391
        %v1393 = vmul.f32 %v1388, %v1388
        %1394 = vadd.xlane.f32.xlu0 %v1393
        %v1395 = vpop.xlane.xlu0 %1394
        %v1396 = vmul.f32 %v1392, 0.0078125
        %v1397 = vmul.f32 %v1395, 0.0078125
        %v1398 = vmul.f32 %v1396, %v1396
        %v1399 = vsub.f32 %v1397, %v1398
        %v1400 = vsub.f32 %v1388, %v1396
        %v1401 = vadd.f32 %v1399, 1e-06
        %v1402 = vrsqrt.pop %v1401
        %v1403 = vmul.f32 %v1400, %v1402
        %v1405 = vlaneseq
        %v1406 = vshrl.u32 %v1405, 7
        %v1407 = vsub.s32 0, %v1406
        %v1408 = vrot.slane %v1389, %v1407
        %v1410 = vmul.f32 %v1403, %v1408
        %v1412 = vlaneseq
        %v1413 = vshrl.u32 %v1412, 7
        %v1414 = vsub.s32 0, %v1413
        %v1415 = vrot.slane %v1390, %v1414
        %v1417 = vadd.f32 %v1410, %v1415
        %v1418 = vpack.c.bf16 %v1417, %v1417
        %v1419 = vld [vmem:[#allocation10] sm:$0xff]
        %v1420 = vld [vmem:[#allocation10 + $0x8] sm:$0xff]
        %v1421 = vld [vmem:[#allocation10 + $0x10] sm:$0xff]
        %v1422 = vld [vmem:[#allocation10 + $0x18] sm:$0xff]
        %v1423 = vld [vmem:[#allocation10 + $0x20] sm:$0xff]
        %v1424 = vld [vmem:[#allocation10 + $0x28] sm:$0xff]
        %v1425 = vld [vmem:[#allocation10 + $0x30] sm:$0xff]
        %v1426 = vld [vmem:[#allocation10 + $0x38] sm:$0xff]
        %v1427 = vld [vmem:[#allocation10 + $0x40] sm:$0xff]
        %v1428 = vld [vmem:[#allocation10 + $0x48] sm:$0xff]
        %v1429 = vld [vmem:[#allocation10 + $0x50] sm:$0xff]
        %v1430 = vld [vmem:[#allocation10 + $0x58] sm:$0xff]
        %v1431 = vld [vmem:[#allocation10 + $0x60] sm:$0xff]
        %v1432 = vld [vmem:[#allocation10 + $0x68] sm:$0xff]
        %v1433 = vld [vmem:[#allocation10 + $0x70] sm:$0xff]
        %v1434 = vld [vmem:[#allocation10 + $0x78] sm:$0xff]
        %v1435 = vld [vmem:[%s11] sm:$0x3]
        %v1437 = vlaneseq
        %v1438 = vshrl.u32 %v1437, 7
        %v1439 = vsub.s32 0, %v1438
        %v1440 = vrot.slane %v1435, %v1439
        %v1441 = vlaneseq
        %v1442 = vshrl.u32 %v1441, 7
        %v1443 = vsub.s32 1, %v1442
        %v1444 = vrot.slane %v1435, %v1443
        %v1463 = vunpack.c.l.b16 %v1419
        %v1464 = vunpack.c.h.b16 %v1419
        %v1465 = vunpack.c.l.b16 %v1420
        %v1466 = vunpack.c.h.b16 %v1420
        %v1467 = vunpack.c.l.b16 %v1421
        %v1468 = vunpack.c.h.b16 %v1421
        %v1469 = vunpack.c.l.b16 %v1422
        %v1470 = vunpack.c.h.b16 %v1422
        %v1471 = vunpack.c.l.b16 %v1423
        %v1472 = vunpack.c.h.b16 %v1423
        %v1473 = vunpack.c.l.b16 %v1424
        %v1474 = vunpack.c.h.b16 %v1424
        %v1475 = vunpack.c.l.b16 %v1425
        %v1476 = vunpack.c.h.b16 %v1425
        %v1477 = vunpack.c.l.b16 %v1426
        %v1478 = vunpack.c.h.b16 %v1426
        %v1479 = vunpack.c.l.b16 %v1427
        %v1480 = vunpack.c.h.b16 %v1427
        %v1481 = vunpack.c.l.b16 %v1428
        %v1482 = vunpack.c.h.b16 %v1428
        %v1483 = vunpack.c.l.b16 %v1429
        %v1484 = vunpack.c.h.b16 %v1429
        %v1485 = vunpack.c.l.b16 %v1430
        %v1486 = vunpack.c.h.b16 %v1430
        %v1487 = vunpack.c.l.b16 %v1431
        %v1488 = vunpack.c.h.b16 %v1431
        %v1489 = vunpack.c.l.b16 %v1432
        %v1490 = vunpack.c.h.b16 %v1432
        %v1491 = vunpack.c.l.b16 %v1433
        %v1492 = vunpack.c.h.b16 %v1433
        %v1493 = vunpack.c.l.b16 %v1434
        %v1494 = vunpack.c.h.b16 %v1434
        %v1495 = vpack.c.b16 %v1465, %v1463
        %v1496 = vpack.c.b16 %v1466, %v1464
        %v1497 = vpack.c.b16 %v1469, %v1467
        %v1498 = vpack.c.b16 %v1470, %v1468
        %v1499 = vpack.c.b16 %v1473, %v1471
        %v1500 = vpack.c.b16 %v1474, %v1472
        %v1501 = vpack.c.b16 %v1477, %v1475
        %v1502 = vpack.c.b16 %v1478, %v1476
        %v1503 = vpack.c.b16 %v1481, %v1479
        %v1504 = vpack.c.b16 %v1482, %v1480
        %v1505 = vpack.c.b16 %v1485, %v1483
        %v1506 = vpack.c.b16 %v1486, %v1484
        %v1507 = vpack.c.b16 %v1489, %v1487
        %v1508 = vpack.c.b16 %v1490, %v1488
        %v1509 = vpack.c.b16 %v1493, %v1491
        %v1510 = vpack.c.b16 %v1494, %v1492
        %1527 = vmatprep.subr.bf16.mxu0 %v1496
        %1528 = vmatpush1.bf16.msra.mxu0 %v1495
        %1529 = vmatprep.subr.bf16.mxu0 %v1498
        %1530 = vmatpush1.bf16.msra.mxu0 %v1497
        %1531 = vmatprep.subr.bf16.mxu0 %v1500
        %1532 = vmatpush1.bf16.msra.mxu0 %v1499
        %1533 = vmatprep.subr.bf16.mxu0 %v1502
        %1534 = vmatpush1.bf16.msra.mxu0 %v1501
        %1535 = vmatprep.subr.bf16.mxu0 %v1504
        %1536 = vmatpush1.bf16.msra.mxu0 %v1503
        %1537 = vmatprep.subr.bf16.mxu0 %v1506
        %1538 = vmatpush1.bf16.msra.mxu0 %v1505
        %1539 = vmatprep.subr.bf16.mxu0 %v1508
        %1540 = vmatpush1.bf16.msra.mxu0 %v1507
        %1541 = vmatprep.subr.bf16.mxu0 %v1510
        %1542 = vmatpush1.bf16.msra.mxu0 %v1509
        %1543 = vmatprep.subr.bf16.mxu0 0
        %1544 = vmatpush1.bf16.msra.mxu0 0
        %1545 = vmatprep.subr.bf16.mxu0 0
        %1546 = vmatpush1.bf16.msra.mxu0 0
        %1547 = vmatprep.subr.bf16.mxu0 0
        %1548 = vmatpush1.bf16.msra.mxu0 0
        %1549 = vmatprep.subr.bf16.mxu0 0
        %1550 = vmatpush1.bf16.msra.mxu0 0
        %1551 = vmatprep.subr.bf16.mxu0 0
        %1552 = vmatpush1.bf16.msra.mxu0 0
        %1553 = vmatprep.subr.bf16.mxu0 0
        %1554 = vmatpush1.bf16.msra.mxu0 0
        %1555 = vmatprep.subr.bf16.mxu0 0
        %1556 = vmatpush1.bf16.msra.mxu0 0
        %1557 = vmatprep.subr.bf16.mxu0 0
        %1558 = vmatpush1.bf16.msra.mxu0 0
        %1559 = vmatprep.mubr.bf16.mxu0 0
        %1560 = vmatmul.mubr.bf16.gmra.mrb[0].mxu0 %v1418
        %v1561 = vpop.f32.mrb[0].mxu0
        %v1562 = vadd.f32 %v1440, %v1561
        %v1563 = vpop.f32.mrb[0].mxu0
        %v1564 = vadd.f32 %v1444, %v1563
        %v1565 = vpop.f32.mrb[0].mxu0
        %v1566 = vpop.f32.mrb[0].mxu0
        %1567 = vdwg.mxu0
        %v1568 = vmax.f32 %v1562, 0.0
        %v1569 = vmax.f32 %v1564, 0.0
        %v1570 = vpack.c.bf16 %v1568, %v1568
        %v1571 = vpack.c.bf16 %v1569, %v1569
        %v1572 = vld [vmem:[#allocation12] sm:$0xf]
        %v1573 = vld [vmem:[#allocation12 + $0x4] sm:$0xf]
        %v1574 = vld [vmem:[#allocation12 + $0x8] sm:$0xf]
        %v1575 = vld [vmem:[#allocation12 + $0xc] sm:$0xf]
        %v1576 = vld [vmem:[#allocation12 + $0x10] sm:$0xf]
        %v1577 = vld [vmem:[#allocation12 + $0x14] sm:$0xf]
        %v1578 = vld [vmem:[#allocation12 + $0x18] sm:$0xf]
        %v1579 = vld [vmem:[#allocation12 + $0x1c] sm:$0xf]
        %v1580 = vld [vmem:[#allocation12 + $0x20] sm:$0xf]
        %v1581 = vld [vmem:[#allocation12 + $0x24] sm:$0xf]
        %v1582 = vld [vmem:[#allocation12 + $0x28] sm:$0xf]
        %v1583 = vld [vmem:[#allocation12 + $0x2c] sm:$0xf]
        %v1584 = vld [vmem:[#allocation12 + $0x30] sm:$0xf]
        %v1585 = vld [vmem:[#allocation12 + $0x34] sm:$0xf]
        %v1586 = vld [vmem:[#allocation12 + $0x38] sm:$0xf]
        %v1587 = vld [vmem:[#allocation12 + $0x3c] sm:$0xf]
        %v1588 = vld [vmem:[#allocation12 + $0x40] sm:$0xf]
        %v1589 = vld [vmem:[#allocation12 + $0x44] sm:$0xf]
        %v1590 = vld [vmem:[#allocation12 + $0x48] sm:$0xf]
        %v1591 = vld [vmem:[#allocation12 + $0x4c] sm:$0xf]
        %v1592 = vld [vmem:[#allocation12 + $0x50] sm:$0xf]
        %v1593 = vld [vmem:[#allocation12 + $0x54] sm:$0xf]
        %v1594 = vld [vmem:[#allocation12 + $0x58] sm:$0xf]
        %v1595 = vld [vmem:[#allocation12 + $0x5c] sm:$0xf]
        %v1596 = vld [vmem:[#allocation12 + $0x60] sm:$0xf]
        %v1597 = vld [vmem:[#allocation12 + $0x64] sm:$0xf]
        %v1598 = vld [vmem:[#allocation12 + $0x68] sm:$0xf]
        %v1599 = vld [vmem:[#allocation12 + $0x6c] sm:$0xf]
        %v1600 = vld [vmem:[#allocation12 + $0x70] sm:$0xf]
        %v1601 = vld [vmem:[#allocation12 + $0x74] sm:$0xf]
        %v1602 = vld [vmem:[#allocation12 + $0x78] sm:$0xf]
        %v1603 = vld [vmem:[#allocation12 + $0x7c] sm:$0xf]
        %v1604 = vld [vmem:[%s13] sm:$0x1]
        %v1606 = vlaneseq
        %v1607 = vshrl.u32 %v1606, 7
        %v1608 = vsub.s32 0, %v1607
        %v1609 = vrot.slane %v1604, %v1608
        %v1643 = vunpack.c.l.b16 %v1572
        %v1644 = vunpack.c.l.b16 %v1573
        %v1645 = vunpack.c.l.b16 %v1574
        %v1646 = vunpack.c.l.b16 %v1575
        %v1647 = vunpack.c.l.b16 %v1576
        %v1648 = vunpack.c.l.b16 %v1577
        %v1649 = vunpack.c.l.b16 %v1578
        %v1650 = vunpack.c.l.b16 %v1579
        %v1651 = vunpack.c.l.b16 %v1580
        %v1652 = vunpack.c.l.b16 %v1581
        %v1653 = vunpack.c.l.b16 %v1582
        %v1654 = vunpack.c.l.b16 %v1583
        %v1655 = vunpack.c.l.b16 %v1584
        %v1656 = vunpack.c.l.b16 %v1585
        %v1657 = vunpack.c.l.b16 %v1586
        %v1658 = vunpack.c.l.b16 %v1587
        %v1659 = vunpack.c.l.b16 %v1588
        %v1660 = vunpack.c.l.b16 %v1589
        %v1661 = vunpack.c.l.b16 %v1590
        %v1662 = vunpack.c.l.b16 %v1591
        %v1663 = vunpack.c.l.b16 %v1592
        %v1664 = vunpack.c.l.b16 %v1593
        %v1665 = vunpack.c.l.b16 %v1594
        %v1666 = vunpack.c.l.b16 %v1595
        %v1667 = vunpack.c.l.b16 %v1596
        %v1668 = vunpack.c.l.b16 %v1597
        %v1669 = vunpack.c.l.b16 %v1598
        %v1670 = vunpack.c.l.b16 %v1599
        %v1671 = vunpack.c.l.b16 %v1600
        %v1672 = vunpack.c.l.b16 %v1601
        %v1673 = vunpack.c.l.b16 %v1602
        %v1674 = vunpack.c.l.b16 %v1603
        %v1675 = vpack.c.b16 %v1644, %v1643
        %v1676 = vpack.c.b16 %v1646, %v1645
        %v1677 = vpack.c.b16 %v1648, %v1647
        %v1678 = vpack.c.b16 %v1650, %v1649
        %v1679 = vpack.c.b16 %v1652, %v1651
        %v1680 = vpack.c.b16 %v1654, %v1653
        %v1681 = vpack.c.b16 %v1656, %v1655
        %v1682 = vpack.c.b16 %v1658, %v1657
        %v1683 = vpack.c.b16 %v1660, %v1659
        %v1684 = vpack.c.b16 %v1662, %v1661
        %v1685 = vpack.c.b16 %v1664, %v1663
        %v1686 = vpack.c.b16 %v1666, %v1665
        %v1687 = vpack.c.b16 %v1668, %v1667
        %v1688 = vpack.c.b16 %v1670, %v1669
        %v1689 = vpack.c.b16 %v1672, %v1671
        %v1690 = vpack.c.b16 %v1674, %v1673
        %1707 = vmatprep.subr.bf16.mxu0 0
        %1708 = vmatpush1.bf16.msra.mxu0 %v1675
        %1709 = vmatprep.subr.bf16.mxu0 0
        %1710 = vmatpush1.bf16.msra.mxu0 %v1676
        %1711 = vmatprep.subr.bf16.mxu0 0
        %1712 = vmatpush1.bf16.msra.mxu0 %v1677
        %1713 = vmatprep.subr.bf16.mxu0 0
        %1714 = vmatpush1.bf16.msra.mxu0 %v1678
        %1715 = vmatprep.subr.bf16.mxu0 0
        %1716 = vmatpush1.bf16.msra.mxu0 %v1679
        %1717 = vmatprep.subr.bf16.mxu0 0
        %1718 = vmatpush1.bf16.msra.mxu0 %v1680
        %1719 = vmatprep.subr.bf16.mxu0 0
        %1720 = vmatpush1.bf16.msra.mxu0 %v1681
        %1721 = vmatprep.subr.bf16.mxu0 0
        %1722 = vmatpush1.bf16.msra.mxu0 %v1682
        %1723 = vmatprep.subr.bf16.mxu0 0
        %1724 = vmatpush1.bf16.msra.mxu0 %v1683
        %1725 = vmatprep.subr.bf16.mxu0 0
        %1726 = vmatpush1.bf16.msra.mxu0 %v1684
        %1727 = vmatprep.subr.bf16.mxu0 0
        %1728 = vmatpush1.bf16.msra.mxu0 %v1685
        %1729 = vmatprep.subr.bf16.mxu0 0
        %1730 = vmatpush1.bf16.msra.mxu0 %v1686
        %1731 = vmatprep.subr.bf16.mxu0 0
        %1732 = vmatpush1.bf16.msra.mxu0 %v1687
        %1733 = vmatprep.subr.bf16.mxu0 0
        %1734 = vmatpush1.bf16.msra.mxu0 %v1688
        %1735 = vmatprep.subr.bf16.mxu0 0
        %1736 = vmatpush1.bf16.msra.mxu0 %v1689
        %1737 = vmatprep.subr.bf16.mxu0 0
        %1738 = vmatpush1.bf16.msra.mxu0 %v1690
        %1739 = vmatprep.mubr.bf16.mxu0 %v1571
        %1740 = vmatmul.mubr.bf16.gmra.mrb[0].mxu0 %v1570
        %v1741 = vpop.f32.mrb[0].mxu0
        %v1742 = vadd.f32 %v1609, %v1741
        %v1743 = vpop.f32.mrb[0].mxu0
        %v1744 = vpop.f32.mrb[0].mxu0
        %v1745 = vpop.f32.mrb[0].mxu0
        %1746 = vdwg.mxu0
        %v1747 = vadd.f32 %v1742, %v1388
        %1748 = vst [vmem:[%s518] sm:$0xff] %v1747
        %s1749 = sand.u32 %s323, 1
        %s1750 = scalar_lea.sflag [#allocation6], %s1749
        %s1751 = sand.u32 %s323, 1
        %s1752 = smul.addr %s1751, 8
        %s1753 = scalar_lea.vmem [#allocation13], %s1752
        // Predicated region
        $region93: #{tpu_custom_call.1} parent=71 // pred_check
          %p1754 = pneg %p333
        $region94: #{tpu_custom_call.1} parent=71 // pred_check_branch
          %1756 = sbr.rel (%p1754) target = $region96
        $region95: #{tpu_custom_call.1} parent=71 // pred_region
          %s1758 = ssub.s32 128, 128
          %1759 = vsyncadd %s1750, %s1758
          %s1760 = smul.addr %s37, 128
          %s1761 = scalar_lea.hbm %s14, %s1760
          %s1763 = sshll.u32 %s1753, 4
          %s1764 = int_to_ptr.vmem [resolvable:$true] %s1763
          %1766 = dma.vmem_to_hbm [thread:$0]  %s1764, 128, %s1761, %s1750
        $region96: #{tpu_custom_call.1} parent=71 // pred_fallthru
          _
      $region72: #{tpu_custom_call.1} parent=5 // pred_fallthru
        _
      %p1767 = scmp.le.s32.totalorder 2, %s32
      // Predicated region
      $region97: #{tpu_custom_call.1} parent=5 // pred_check
        %p1768 = pneg %p1767
      $region98: #{tpu_custom_call.1} parent=5 // pred_check_branch
        %1770 = sbr.rel (%p1768) target = $region100
      $region99: #{tpu_custom_call.1} parent=5 // pred_region
        %s1771 = ssub.s32 %s32, 2
        // Predicated region
        $region101: #{tpu_custom_call.1} parent=99 // pred_check
          %p1772 = pneg %p339
        $region102: #{tpu_custom_call.1} parent=99 // pred_check_branch
          %1774 = sbr.rel (%p1772) target = $region104
        $region103: #{tpu_custom_call.1} parent=99 // pred_region
          %s1775 = sand.u32 %s324, 1
          %s1776 = scalar_lea.sflag [#allocation6], %s1775
          %s1777 = sand.u32 %s324, 1
          %s1778 = smul.addr %s1777, 8
          %s1779 = scalar_lea.vmem [#allocation13], %s1778
          %1780 = dma.done %s1776, 128
        $region104: #{tpu_custom_call.1} parent=99 // pred_fallthru
          _
      $region100: #{tpu_custom_call.1} parent=5 // pred_fallthru
        _
    $region6: #{tpu_custom_call.1} parent=1 // loop_footer
      %s36 = sadd.s32 1, %s32
    $region7: #{tpu_custom_call.1} parent=1 // loop_footer_branch
      %31 = sbr.rel target = $region3
    $region8: #{tpu_custom_call.1} parent=1 // loop_exit
      _
    %1781 = vsyncpa [#allocation5], 1
    %s1782 = scalar_lea.sflag [#allocation5], 1
    %1783 = vsyncpa %s1782, 1
    %1784 = vsyncpa [#allocation8], 1
    %1785 = vsyncpa [#allocation11], 1
    %1786 = vsyncpa [#allocation6], 1
    %s1787 = scalar_lea.sflag [#allocation6], 1
    %1788 = vsyncpa %s1787, 1

</llo_original>
